<compile_context>
chip_gen: v7x
topology: tpu7x:2x2x1
jax: 0.10.0
libtpu: 0.0.40
codegen_flags: <defaults>
</compile_context>

<pallas_src>
import functools

import jax
import jax.numpy as jnp
from jax.experimental import pallas as pl
from jax.experimental.pallas import tpu as pltpu


MXU_DTYPE = jnp.bfloat16          # MXU operand dtype (f32 accumulation)
LANE = 128
_MIB = 1024 * 1024


def _vmem_capacity_bytes():
    # Generation-aware VMEM sizing (v5e/v6e: 128 MiB, v7x: 64 MiB per TC).
    try:
        cap = int(pltpu.get_tpu_info().vmem_capacity_bytes)
        if cap > 0:
            return cap
    except Exception:
        pass
    return 64 * _MIB  # conservative default (v7x-sized)


_VMEM_CAP = _vmem_capacity_bytes()
# Leave >=16 MiB headroom for Mosaic internal scratch / semaphores.
VMEM_LIMIT = max(32 * _MIB, min(_VMEM_CAP - 16 * _MIB, 112 * _MIB))
# Token-axis tile: 1024 on 128 MiB parts (v5e/v6e), 512 on v7x.
TOKEN_TILE_CAP = 1024 if _VMEM_CAP >= 96 * _MIB else 512
# MLP intermediate-dimension chunk (bounds the live (tm, chunk) fc1 activation).
MLP_CHUNK = 1024


def _compiler_params(n_parallel_axes):
    return pltpu.CompilerParams(
        dimension_semantics=("parallel",) * n_parallel_axes,
        vmem_limit_bytes=VMEM_LIMIT,
    )


def _pick_tile_m(m):
    # Small M -> single full block (satisfies the (8,128)/full-dim rule).
    # Large M -> fixed multiple-of-8 tile; Pallas masks the partial last block.
    return m if m <= TOKEN_TILE_CAP else TOKEN_TILE_CAP


def _resident():
    # Whole-array operand held once in VMEM (no double buffering).  Used for
    # every grid-invariant weight / bias so resident weights cost 1x VMEM.
    return pl.BlockSpec(memory_space=pltpu.MemorySpace.VMEM)


def _layernorm_f32(x, g, b, eps=1e-5):
    x = x.astype(jnp.float32)
    mu = jnp.mean(x, axis=-1, keepdims=True)
    xc = x - mu
    var = jnp.mean(xc * xc, axis=-1, keepdims=True)
    return xc * jax.lax.rsqrt(var + eps) * g + b


# ----------------------------- Pallas kernels -----------------------------

def _ln_kernel(x_ref, g_ref, b_ref, o_ref):
    o_ref[...] = _layernorm_f32(x_ref[...], g_ref[...], b_ref[...]).astype(o_ref.dtype)


def layernorm(x2d, g, b):
    m, e = x2d.shape
    tm = _pick_tile_m(m)
    return pl.pallas_call(
        _ln_kernel,
        out_shape=jax.ShapeDtypeStruct((m, e), jnp.float32),
        grid=(pl.cdiv(m, tm),),
        in_specs=[
            pl.BlockSpec((tm, e), lambda i: (i, 0)),
            _resident(),
            _resident(),
        ],
        out_specs=pl.BlockSpec((tm, e), lambda i: (i, 0)),
        compiler_params=_compiler_params(1),
    )(x2d, g, b)


def _matmul_kernel(x_ref, w_ref, o_ref):
    # bias-less matmul (patch embedding projection)
    o_ref[...] = jnp.dot(
        x_ref[...].astype(MXU_DTYPE), w_ref[...],
        preferred_element_type=jnp.float32,
    ).astype(o_ref.dtype)


def patch_proj(patches, w_t):
    m, k = patches.shape
    n = w_t.shape[1]
    tm = _pick_tile_m(m)
    return pl.pallas_call(
        _matmul_kernel,
        out_shape=jax.ShapeDtypeStruct((m, n), jnp.float32),
        grid=(pl.cdiv(m, tm),),
        in_specs=[
            pl.BlockSpec((tm, k), lambda i: (i, 0)),
            _resident(),                              # patch weight, resident
        ],
        out_specs=pl.BlockSpec((tm, n), lambda i: (i, 0)),
        compiler_params=_compiler_params(1),
    )(patches, w_t)


def _ln1_attn_kernel(h_ref, g_ref, b_ref, wqkv_ref, bqkv_ref, ow_ref, ob_ref,
                     o_ref, *, nh, dh):
    # One batch element per grid step.  LayerNorm1 + packed QKV matmul +
    # per-head attention + output projection + residual, fully fused so the
    # (S, 3E) qkv activation never touches HBM.  Head outputs are folded
    # directly into the o-projection accumulator (no concat, no relayout).
    e = nh * dh
    x = h_ref[0].astype(jnp.float32)                 # (S, E) residual input
    xn = _layernorm_f32(x, g_ref[...], b_ref[...]).astype(MXU_DTYPE)
    qkv = (
        jnp.dot(xn, wqkv_ref[...], preferred_element_type=jnp.float32)
        + bqkv_ref[...]
    )                                                # (S, 3E) f32, q pre-scaled

    acc = x + ob_ref[...]                            # residual + o-proj bias
    for h in range(nh):
        lo, hi = h * dh, (h + 1) * dh
        qh = qkv[:, lo:hi].astype(MXU_DTYPE)
        kh = qkv[:, e + lo:e + hi].astype(MXU_DTYPE)
        vh = qkv[:, 2 * e + lo:2 * e + hi].astype(MXU_DTYPE)
        # scores: contract head dim of q and k without an explicit transpose
        s = jax.lax.dot_general(
            qh, kh, (((1,), (1,)), ((), ())), preferred_element_type=jnp.float32
        )                                            # (S, S) f32
        mx = jnp.max(s, axis=-1, keepdims=True)
        p = jnp.exp(s - mx)
        p = p * pl.reciprocal(jnp.sum(p, axis=-1, keepdims=True), approx=True)
        hv = jnp.dot(p.astype(MXU_DTYPE), vh, preferred_element_type=jnp.float32)
        # accumulate this head's o-projection partial into the (S, E) output
        acc = acc + jnp.dot(
            hv.astype(MXU_DTYPE), ow_ref[lo:hi, :], preferred_element_type=jnp.float32
        )
    o_ref[0] = acc.astype(o_ref.dtype)


def attention_block(h_bse, ln_g, ln_b, w_qkv, b_qkv, o_w_t, o_b, nh):
    b, s, e = h_bse.shape
    dh = e // nh
    kern = functools.partial(_ln1_attn_kernel, nh=nh, dh=dh)
    return pl.pallas_call(
        kern,
        out_shape=jax.ShapeDtypeStruct((b, s, e), jnp.float32),
        grid=(b,),
        in_specs=[
            pl.BlockSpec((1, s, e), lambda i: (i, 0, 0)),
            _resident(),                              # ln1 gamma
            _resident(),                              # ln1 beta
            _resident(),                              # packed (E, 3E) qkv weight
            _resident(),                              # qkv bias (q pre-scaled)
            _resident(),                              # (E, E) o-proj weight
            _resident(),                              # o-proj bias
        ],
        out_specs=pl.BlockSpec((1, s, e), lambda i: (i, 0, 0)),
        compiler_params=_compiler_params(1),
    )(h_bse, ln_g, ln_b, w_qkv, b_qkv, o_w_t, o_b)


def _ln_mlp_kernel(x_ref, g_ref, b_ref, w1_ref, b1_ref, w2_ref, b2_ref, o_ref,
                   *, i_chunk):
    # LayerNorm2 + fc1 + quick_gelu + fc2 + residual.  The intermediate
    # dimension is processed in chunks so only a (tm, chunk) fc1 activation is
    # live at a time; fc2 partial products accumulate into a (tm, E) f32 value.
    x = x_ref[...].astype(jnp.float32)
    xn = _layernorm_f32(x, g_ref[...], b_ref[...]).astype(MXU_DTYPE)
    i_dim = w1_ref.shape[1]
    acc = x + b2_ref[...]                            # residual + fc2 bias
    for c0 in range(0, i_dim, i_chunk):
        c1 = min(c0 + i_chunk, i_dim)
        h1 = (
            jnp.dot(xn, w1_ref[:, c0:c1], preferred_element_type=jnp.float32)
            + b1_ref[:, c0:c1]
        )
        h1 = h1 * (1.0 / (1.0 + jnp.exp(-1.702 * h1)))   # CLIP quick_gelu
        acc = acc + jnp.dot(
            h1.astype(MXU_DTYPE), w2_ref[c0:c1, :], preferred_element_type=jnp.float32
        )
    o_ref[...] = acc.astype(o_ref.dtype)


def ln_mlp(x2d, g, b, w1_t, b1, w2_t, b2):
    m, e = x2d.shape
    i_dim = w1_t.shape[1]
    tm = _pick_tile_m(m)
    kern = functools.partial(_ln_mlp_kernel, i_chunk=min(i_dim, MLP_CHUNK))
    return pl.pallas_call(
        kern,
        out_shape=jax.ShapeDtypeStruct((m, e), jnp.float32),
        grid=(pl.cdiv(m, tm),),
        in_specs=[
            pl.BlockSpec((tm, e), lambda i: (i, 0)),
            _resident(),                              # ln2 gamma
            _resident(),                              # ln2 beta
            _resident(),                              # (E, I) fc1 weight
            _resident(),                              # fc1 bias
            _resident(),                              # (I, E) fc2 weight
            _resident(),                              # fc2 bias
        ],
        out_specs=pl.BlockSpec((tm, e), lambda i: (i, 0)),
        compiler_params=_compiler_params(1),
    )(x2d, g, b, w1_t, b1, w2_t, b2)


def _ln_head_kernel(x_ref, g_ref, b_ref, w_ref, bias_ref, o_ref):
    # post_layernorm on the CLS token fused with the (lane-padded) classifier.
    xn = _layernorm_f32(x_ref[...], g_ref[...], b_ref[...])
    o_ref[...] = (
        jnp.dot(xn.astype(MXU_DTYPE), w_ref[...], preferred_element_type=jnp.float32)
        + bias_ref[...]
    ).astype(o_ref.dtype)


def ln_head(pooled, g, b, w_pad, b_pad):
    batch = pooled.shape[0]
    n_pad = w_pad.shape[1]
    return pl.pallas_call(
        _ln_head_kernel,
        out_shape=jax.ShapeDtypeStruct((batch, n_pad), jnp.float32),
        in_specs=[_resident()] * 5,
        out_specs=pl.BlockSpec(memory_space=pltpu.MemorySpace.VMEM),
        compiler_params=pltpu.CompilerParams(vmem_limit_bytes=VMEM_LIMIT),
    )(pooled, g, b, w_pad, b_pad)


# ----------------------------- model forward ------------------------------

def clip_visual_forward(x, params, cfg):
    """x: (B, 3, H, W) float32 NCHW.  Returns logits (B, num_classes)."""
    b, c, hh, ww = x.shape
    p = cfg["patch_size"]
    e = cfg["embed_dim"]
    nh = cfg["num_heads"]
    hp, wp = hh // p, ww // p
    n_patches = hp * wp
    s = n_patches + 1

    # conv(kernel=stride=patch, no bias) == patch-flatten + matmul
    patches = (
        x.reshape(b, c, hp, p, wp, p)
        .transpose(0, 2, 4, 1, 3, 5)                 # (B, Hp, Wp, C, p, p)
        .reshape(b * n_patches, c * p * p)
    )
    patch_emb = patch_proj(patches, params["patch_w_t"]).reshape(b, n_patches, e)

    cls = jnp.broadcast_to(params["class_emb"].reshape(1, 1, e), (b, 1, e))
    h = jnp.concatenate([cls, patch_emb], axis=1) + params["pos_emb"][None]
    h = layernorm(h.reshape(b * s, e), params["pre_ln_g"], params["pre_ln_b"])
    h = h.reshape(b, s, e)

    for lp in params["layers"]:
        # (1) LN1 + QKV + attention + o-proj + residual (one fused kernel)
        h = attention_block(
            h, lp["ln1_g"], lp["ln1_b"], lp["w_qkv"], lp["b_qkv"],
            lp["o_w_t"], lp["o_b"], nh,
        )
        # (2) LN2 + MLP (chunked intermediate) + residual
        h = ln_mlp(
            h.reshape(b * s, e), lp["ln2_g"], lp["ln2_b"],
            lp["fc1_w_t"], lp["fc1_b"], lp["fc2_w_t"], lp["fc2_b"],
        ).reshape(b, s, e)

    pooled = h[:, 0, :]                              # CLS token
    logits_pad = ln_head(
        pooled, params["post_ln_g"], params["post_ln_b"],
        params["fc_w_t"], params["fc_b_pad"],
    )
    return logits_pad[:, : cfg["num_classes"]]


# ----------------------------- parameter init -----------------------------
# TODO(synk): pretrained CLIP checkpoint loading is out of scope; weights are
# deterministic random stand-ins with the correct shapes, pre-laid-out for TPU
# (transposed to (K, N), packed QKV with folded scale, bf16 MXU operands).

def init_params(key, cfg):
    c, p, e, i_dim, n_layers, nc = (
        cfg["in_channels"], cfg["patch_size"], cfg["embed_dim"],
        cfg["intermediate"], cfg["num_layers"], cfg["num_classes"],
    )
    nh = cfg["num_heads"]
    dh = e // nh
    scale = dh ** -0.5
    n_pos = (cfg["image_size"] // p) ** 2 + 1
    nc_pad = max(LANE, ((nc + LANE - 1) // LANE) * LANE)

    def nrm(k, shape, std=0.02):
        return jax.random.normal(k, shape, jnp.float32) * std

    keys = iter(jax.random.split(key, 16 + 16 * n_layers))

    patch_w = nrm(next(keys), (e, c, p, p))          # torch conv layout
    fc_w = nrm(next(keys), (nc, e))
    fc_b = nrm(next(keys), (nc,))
    fc_w_pad = jnp.zeros((e, nc_pad), jnp.float32).at[:, :nc].set(fc_w.T)
    fc_b_pad = jnp.zeros((1, nc_pad), jnp.float32).at[0, :nc].set(fc_b)

    params = {
        "patch_w_t": patch_w.reshape(e, c * p * p).T.astype(MXU_DTYPE),
        "class_emb": nrm(next(keys), (e,)),
        "pos_emb": nrm(next(keys), (n_pos, e)),
        "pre_ln_g": jnp.ones((1, e), jnp.float32),
        "pre_ln_b": jnp.zeros((1, e), jnp.float32),
        "post_ln_g": jnp.ones((1, e), jnp.float32),
        "post_ln_b": jnp.zeros((1, e), jnp.float32),
        "fc_w_t": fc_w_pad.astype(MXU_DTYPE),
        "fc_b_pad": fc_b_pad,
        "layers": [],
    }
    for _ in range(n_layers):
        q_w, q_b = nrm(next(keys), (e, e)), nrm(next(keys), (e,))
        k_w, k_b = nrm(next(keys), (e, e)), nrm(next(keys), (e,))
        v_w, v_b = nrm(next(keys), (e, e)), nrm(next(keys), (e,))
        o_w, o_b = nrm(next(keys), (e, e)), nrm(next(keys), (e,))
        fc1_w, fc1_b = nrm(next(keys), (i_dim, e)), nrm(next(keys), (i_dim,))
        fc2_w, fc2_b = nrm(next(keys), (e, i_dim)), nrm(next(keys), (e,))
        # pack Q/K/V into one (E, 3E) operand; fold the attention scale into q
        w_qkv = jnp.concatenate([q_w.T * scale, k_w.T, v_w.T], axis=1)
        b_qkv = jnp.concatenate([q_b * scale, k_b, v_b]).reshape(1, 3 * e)
        params["layers"].append({
            "ln1_g": jnp.ones((1, e), jnp.float32),
            "ln1_b": jnp.zeros((1, e), jnp.float32),
            "w_qkv": w_qkv.astype(MXU_DTYPE),
            "b_qkv": b_qkv,
            "o_w_t": o_w.T.astype(MXU_DTYPE),
            "o_b": o_b.reshape(1, e),
            "ln2_g": jnp.ones((1, e), jnp.float32),
            "ln2_b": jnp.zeros((1, e), jnp.float32),
            "fc1_w_t": fc1_w.T.astype(MXU_DTYPE),
            "fc1_b": fc1_b.reshape(1, i_dim),
            "fc2_w_t": fc2_w.T.astype(MXU_DTYPE),
            "fc2_b": fc2_b.reshape(1, e),
        })
    return params


if __name__ == "__main__":
    cfg = dict(
        image_size=16,
        patch_size=8,
        in_channels=3,
        embed_dim=32,
        num_heads=4,
        intermediate=64,
        num_layers=2,
        num_classes=2,
    )

    key = jax.random.PRNGKey(0)
    k_x, k_p = jax.random.split(key)
    x = jax.random.normal(
        k_x, (2, cfg["in_channels"], cfg["image_size"], cfg["image_size"]),
        dtype=jnp.float32,
    )
    params = init_params(k_p, cfg)

    fwd = jax.jit(functools.partial(clip_visual_forward, cfg=cfg))
    logits = jax.block_until_ready(fwd(x, params))
    assert logits.shape == (2, cfg["num_classes"])
    assert bool(jnp.all(jnp.isfinite(logits)))
    print("KERNEL_OK")
</pallas_src>

<mosaic_0001>
module attributes {stable_mosaic.version = 11 : i64} {
  func.func @_ln_kernel(%arg0: i32, %arg1: memref<10x32xf32, #tpu.memory_space<vmem>>, %arg2: memref<1x32xf32, #tpu.memory_space<vmem>>, %arg3: memref<1x32xf32, #tpu.memory_space<vmem>>, %arg4: memref<10x32xf32, #tpu.memory_space<vmem>>) attributes {dimension_semantics = [#tpu.dimension_semantics<parallel>], iteration_bounds = array<i64: 1>, scalar_prefetch = 0 : i64, scratch_operands = 0 : i64, tpu.core_type = #tpu.core_type<tc>, window_params = [{transform_indices = @transform_0, window_bounds = array<i64: 10, 32>}, {pipeline_mode = #tpu.pipeline_mode<synchronous>, transform_indices = @transform_1, window_bounds = array<i64: 1, 32>}, {pipeline_mode = #tpu.pipeline_mode<synchronous>, transform_indices = @transform_2, window_bounds = array<i64: 1, 32>}, {transform_indices = @transform_3, window_bounds = array<i64: 10, 32>}]} {
    %c0 = arith.constant 0 : index
    %c0_0 = arith.constant 0 : index
    %0 = vector.load %arg1[%c0, %c0_0] : memref<10x32xf32, #tpu.memory_space<vmem>>, vector<10x32xf32>
    %c0_1 = arith.constant 0 : index
    %c0_2 = arith.constant 0 : index
    %1 = vector.load %arg2[%c0_1, %c0_2] : memref<1x32xf32, #tpu.memory_space<vmem>>, vector<1x32xf32>
    %c0_3 = arith.constant 0 : index
    %c0_4 = arith.constant 0 : index
    %2 = vector.load %arg3[%c0_3, %c0_4] : memref<1x32xf32, #tpu.memory_space<vmem>>, vector<1x32xf32>
    %cst = arith.constant dense<0.000000e+00> : vector<10xf32>
    %3 = vector.multi_reduction <add>, %0, %cst [1] : vector<10x32xf32> to vector<10xf32>
    %4 = vector.shape_cast %3 : vector<10xf32> to vector<10x1xf32>
    %cst_5 = arith.constant 3.200000e+01 : f32
    %5 = vector.broadcast %cst_5 : f32 to vector<10x1xf32>
    %6 = arith.divf %4, %5 : vector<10x1xf32>
    %7 = vector.broadcast %6 : vector<10x1xf32> to vector<10x32xf32>
    %8 = arith.subf %0, %7 : vector<10x32xf32>
    %9 = arith.mulf %8, %8 : vector<10x32xf32>
    %cst_6 = arith.constant dense<0.000000e+00> : vector<10xf32>
    %10 = vector.multi_reduction <add>, %9, %cst_6 [1] : vector<10x32xf32> to vector<10xf32>
    %11 = vector.shape_cast %10 : vector<10xf32> to vector<10x1xf32>
    %cst_7 = arith.constant 3.200000e+01 : f32
    %12 = vector.broadcast %cst_7 : f32 to vector<10x1xf32>
    %13 = arith.divf %11, %12 : vector<10x1xf32>
    %cst_8 = arith.constant 9.99999974E-6 : f32
    %14 = vector.broadcast %cst_8 : f32 to vector<10x1xf32>
    %15 = arith.addf %13, %14 : vector<10x1xf32>
    %16 = math.rsqrt %15 : vector<10x1xf32>
    %17 = vector.broadcast %16 : vector<10x1xf32> to vector<10x32xf32>
    %18 = arith.mulf %8, %17 : vector<10x32xf32>
    %19 = vector.broadcast %1 : vector<1x32xf32> to vector<10x32xf32>
    %20 = arith.mulf %18, %19 : vector<10x32xf32>
    %21 = vector.broadcast %2 : vector<1x32xf32> to vector<10x32xf32>
    %22 = arith.addf %20, %21 : vector<10x32xf32>
    %c0_9 = arith.constant 0 : index
    %c0_10 = arith.constant 0 : index
    %23 = vector.load %arg4[%c0_9, %c0_10] : memref<10x32xf32, #tpu.memory_space<vmem>>, vector<10x32xf32>
    tpu.vector_store %arg4[%c0_9, %c0_10], %22 {strides = array<i32>} : memref<10x32xf32, #tpu.memory_space<vmem>>, vector<10x32xf32>,
    return
  }
  func.func @transform_0(%arg0: i32) -> (i32, i32) {
    %c0_i32 = arith.constant 0 : i32
    %c0_i32_0 = arith.constant 0 : i32
    return %arg0, %c0_i32 : i32, i32
  }
  func.func @transform_1(%arg0: i32) -> (i32, i32) {
    %c0_i32 = arith.constant 0 : i32
    %c0_i32_0 = arith.constant 0 : i32
    %c0_i32_1 = arith.constant 0 : i32
    return %c0_i32, %c0_i32_0 : i32, i32
  }
  func.func @transform_2(%arg0: i32) -> (i32, i32) {
    %c0_i32 = arith.constant 0 : i32
    %c0_i32_0 = arith.constant 0 : i32
    %c0_i32_1 = arith.constant 0 : i32
    return %c0_i32, %c0_i32_0 : i32, i32
  }
  func.func @transform_3(%arg0: i32) -> (i32, i32) {
    %c0_i32 = arith.constant 0 : i32
    %c0_i32_0 = arith.constant 0 : i32
    return %arg0, %c0_i32 : i32, i32
  }
}

module attributes {stable_mosaic.version = 11 : i64} {
  func.func @_ln1_attn_kernel(%arg0: i32, %arg1: memref<1x5x32xf32, #tpu.memory_space<vmem>>, %arg2: memref<1x32xf32, #tpu.memory_space<vmem>>, %arg3: memref<1x32xf32, #tpu.memory_space<vmem>>, %arg4: memref<32x96xbf16, #tpu.memory_space<vmem>>, %arg5: memref<1x96xf32, #tpu.memory_space<vmem>>, %arg6: memref<32x32xbf16, #tpu.memory_space<vmem>>, %arg7: memref<1x32xf32, #tpu.memory_space<vmem>>, %arg8: memref<1x5x32xf32, #tpu.memory_space<vmem>>) attributes {dimension_semantics = [#tpu.dimension_semantics<parallel>], iteration_bounds = array<i64: 2>, scalar_prefetch = 0 : i64, scratch_operands = 0 : i64, tpu.core_type = #tpu.core_type<tc>, window_params = [{transform_indices = @transform_0, window_bounds = array<i64: 1, 5, 32>}, {pipeline_mode = #tpu.pipeline_mode<synchronous>, transform_indices = @transform_1, window_bounds = array<i64: 1, 32>}, {pipeline_mode = #tpu.pipeline_mode<synchronous>, transform_indices = @transform_2, window_bounds = array<i64: 1, 32>}, {pipeline_mode = #tpu.pipeline_mode<synchronous>, transform_indices = @transform_3, window_bounds = array<i64: 32, 96>}, {pipeline_mode = #tpu.pipeline_mode<synchronous>, transform_indices = @transform_4, window_bounds = array<i64: 1, 96>}, {pipeline_mode = #tpu.pipeline_mode<synchronous>, transform_indices = @transform_5, window_bounds = array<i64: 32, 32>}, {pipeline_mode = #tpu.pipeline_mode<synchronous>, transform_indices = @transform_6, window_bounds = array<i64: 1, 32>}, {transform_indices = @transform_7, window_bounds = array<i64: 1, 5, 32>}]} {
    %c0 = arith.constant 0 : index
    %c0_0 = arith.constant 0 : index
    %c0_1 = arith.constant 0 : index
    %0 = vector.load %arg1[%c0, %c0_0, %c0_1] : memref<1x5x32xf32, #tpu.memory_space<vmem>>, vector<1x5x32xf32>
    %1 = vector.shape_cast %0 : vector<1x5x32xf32> to vector<5x32xf32>
    %c0_2 = arith.constant 0 : index
    %c0_3 = arith.constant 0 : index
    %2 = vector.load %arg2[%c0_2, %c0_3] : memref<1x32xf32, #tpu.memory_space<vmem>>, vector<1x32xf32>
    %c0_4 = arith.constant 0 : index
    %c0_5 = arith.constant 0 : index
    %3 = vector.load %arg3[%c0_4, %c0_5] : memref<1x32xf32, #tpu.memory_space<vmem>>, vector<1x32xf32>
    %cst = arith.constant dense<0.000000e+00> : vector<5xf32>
    %4 = vector.multi_reduction <add>, %1, %cst [1] : vector<5x32xf32> to vector<5xf32>
    %5 = vector.shape_cast %4 : vector<5xf32> to vector<5x1xf32>
    %cst_6 = arith.constant 3.200000e+01 : f32
    %6 = vector.broadcast %cst_6 : f32 to vector<5x1xf32>
    %7 = arith.divf %5, %6 : vector<5x1xf32>
    %8 = vector.broadcast %7 : vector<5x1xf32> to vector<5x32xf32>
    %9 = arith.subf %1, %8 : vector<5x32xf32>
    %10 = arith.mulf %9, %9 : vector<5x32xf32>
    %cst_7 = arith.constant dense<0.000000e+00> : vector<5xf32>
    %11 = vector.multi_reduction <add>, %10, %cst_7 [1] : vector<5x32xf32> to vector<5xf32>
    %12 = vector.shape_cast %11 : vector<5xf32> to vector<5x1xf32>
    %cst_8 = arith.constant 3.200000e+01 : f32
    %13 = vector.broadcast %cst_8 : f32 to vector<5x1xf32>
    %14 = arith.divf %12, %13 : vector<5x1xf32>
    %cst_9 = arith.constant 9.99999974E-6 : f32
    %15 = vector.broadcast %cst_9 : f32 to vector<5x1xf32>
    %16 = arith.addf %14, %15 : vector<5x1xf32>
    %17 = math.rsqrt %16 : vector<5x1xf32>
    %18 = vector.broadcast %17 : vector<5x1xf32> to vector<5x32xf32>
    %19 = arith.mulf %9, %18 : vector<5x32xf32>
    %20 = vector.broadcast %2 : vector<1x32xf32> to vector<5x32xf32>
    %21 = arith.mulf %19, %20 : vector<5x32xf32>
    %22 = vector.broadcast %3 : vector<1x32xf32> to vector<5x32xf32>
    %23 = arith.addf %21, %22 : vector<5x32xf32>
    %24 = arith.truncf %23 : vector<5x32xf32> to vector<5x32xbf16>
    %c0_10 = arith.constant 0 : index
    %c0_11 = arith.constant 0 : index
    %25 = vector.load %arg4[%c0_10, %c0_11] : memref<32x96xbf16, #tpu.memory_space<vmem>>, vector<32x96xbf16>
    %cst_12 = arith.constant dense<0.000000e+00> : vector<5x96xf32>
    %26 = tpu.matmul %24, %25, %cst_12 {dimension_numbers = #tpu.dot_dimension_numbers<[1], [0], [0], [1], [0, 0, 1, 1], [], []>} : vector<5x32xbf16>, vector<32x96xbf16>, vector<5x96xf32> -> vector<5x96xf32>
    %c0_13 = arith.constant 0 : index
    %c0_14 = arith.constant 0 : index
    %27 = vector.load %arg5[%c0_13, %c0_14] : memref<1x96xf32, #tpu.memory_space<vmem>>, vector<1x96xf32>
    %28 = vector.broadcast %27 : vector<1x96xf32> to vector<5x96xf32>
    %29 = arith.addf %26, %28 : vector<5x96xf32>
    %c0_15 = arith.constant 0 : index
    %c0_16 = arith.constant 0 : index
    %30 = vector.load %arg7[%c0_15, %c0_16] : memref<1x32xf32, #tpu.memory_space<vmem>>, vector<1x32xf32>
    %31 = vector.broadcast %30 : vector<1x32xf32> to vector<5x32xf32>
    %32 = arith.addf %1, %31 : vector<5x32xf32>
    %33 = vector.extract_strided_slice %29 {offsets = [0, 0], sizes = [5, 8], strides = [1, 1]} : vector<5x96xf32> to vector<5x8xf32>
    %34 = arith.truncf %33 : vector<5x8xf32> to vector<5x8xbf16>
    %35 = vector.extract_strided_slice %29 {offsets = [0, 32], sizes = [5, 8], strides = [1, 1]} : vector<5x96xf32> to vector<5x8xf32>
    %36 = arith.truncf %35 : vector<5x8xf32> to vector<5x8xbf16>
    %37 = vector.extract_strided_slice %29 {offsets = [0, 64], sizes = [5, 8], strides = [1, 1]} : vector<5x96xf32> to vector<5x8xf32>
    %38 = arith.truncf %37 : vector<5x8xf32> to vector<5x8xbf16>
    %cst_17 = arith.constant dense<0.000000e+00> : vector<5x5xf32>
    %39 = tpu.matmul %34, %36, %cst_17 {dimension_numbers = #tpu.dot_dimension_numbers<[1], [1], [0], [0], [0, 0, 1, 0], [], []>} : vector<5x8xbf16>, vector<5x8xbf16>, vector<5x5xf32> -> vector<5x5xf32>
    %cst_18 = arith.constant dense<0xFF800000> : vector<5xf32>
    %40 = vector.multi_reduction <maximumf>, %39, %cst_18 [1] : vector<5x5xf32> to vector<5xf32>
    %41 = vector.shape_cast %40 : vector<5xf32> to vector<5x1xf32>
    %42 = vector.broadcast %41 : vector<5x1xf32> to vector<5x5xf32>
    %43 = arith.subf %39, %42 : vector<5x5xf32>
    %44 = math.exp %43 : vector<5x5xf32>
    %cst_19 = arith.constant dense<0.000000e+00> : vector<5xf32>
    %45 = vector.multi_reduction <add>, %44, %cst_19 [1] : vector<5x5xf32> to vector<5xf32>
    %46 = vector.shape_cast %45 : vector<5xf32> to vector<5x1xf32>
    %47 = tpu.reciprocal %46 {approx = true} : vector<5x1xf32> -> vector<5x1xf32>
    %48 = vector.broadcast %47 : vector<5x1xf32> to vector<5x5xf32>
    %49 = arith.mulf %44, %48 : vector<5x5xf32>
    %50 = arith.truncf %49 : vector<5x5xf32> to vector<5x5xbf16>
    %cst_20 = arith.constant dense<0.000000e+00> : vector<5x8xf32>
    %51 = tpu.matmul %50, %38, %cst_20 {dimension_numbers = #tpu.dot_dimension_numbers<[1], [0], [0], [1], [0, 0, 1, 1], [], []>} : vector<5x5xbf16>, vector<5x8xbf16>, vector<5x8xf32> -> vector<5x8xf32>
    %52 = arith.truncf %51 : vector<5x8xf32> to vector<5x8xbf16>
    %c0_21 = arith.constant 0 : index
    %c0_22 = arith.constant 0 : index
    %53 = vector.load %arg6[%c0_21, %c0_22] : memref<32x32xbf16, #tpu.memory_space<vmem>>, vector<8x32xbf16>
    %cst_23 = arith.constant dense<0.000000e+00> : vector<5x32xf32>
    %54 = tpu.matmul %52, %53, %cst_23 {dimension_numbers = #tpu.dot_dimension_numbers<[1], [0], [0], [1], [0, 0, 1, 1], [], []>} : vector<5x8xbf16>, vector<8x32xbf16>, vector<5x32xf32> -> vector<5x32xf32>
    %55 = arith.addf %32, %54 : vector<5x32xf32>
    %56 = vector.extract_strided_slice %29 {offsets = [0, 8], sizes = [5, 8], strides = [1, 1]} : vector<5x96xf32> to vector<5x8xf32>
    %57 = arith.truncf %56 : vector<5x8xf32> to vector<5x8xbf16>
    %58 = vector.extract_strided_slice %29 {offsets = [0, 40], sizes = [5, 8], strides = [1, 1]} : vector<5x96xf32> to vector<5x8xf32>
    %59 = arith.truncf %58 : vector<5x8xf32> to vector<5x8xbf16>
    %60 = vector.extract_strided_slice %29 {offsets = [0, 72], sizes = [5, 8], strides = [1, 1]} : vector<5x96xf32> to vector<5x8xf32>
    %61 = arith.truncf %60 : vector<5x8xf32> to vector<5x8xbf16>
    %cst_24 = arith.constant dense<0.000000e+00> : vector<5x5xf32>
    %62 = tpu.matmul %57, %59, %cst_24 {dimension_numbers = #tpu.dot_dimension_numbers<[1], [1], [0], [0], [0, 0, 1, 0], [], []>} : vector<5x8xbf16>, vector<5x8xbf16>, vector<5x5xf32> -> vector<5x5xf32>
    %cst_25 = arith.constant dense<0xFF800000> : vector<5xf32>
    %63 = vector.multi_reduction <maximumf>, %62, %cst_25 [1] : vector<5x5xf32> to vector<5xf32>
    %64 = vector.shape_cast %63 : vector<5xf32> to vector<5x1xf32>
    %65 = vector.broadcast %64 : vector<5x1xf32> to vector<5x5xf32>
    %66 = arith.subf %62, %65 : vector<5x5xf32>
    %67 = math.exp %66 : vector<5x5xf32>
    %cst_26 = arith.constant dense<0.000000e+00> : vector<5xf32>
    %68 = vector.multi_reduction <add>, %67, %cst_26 [1] : vector<5x5xf32> to vector<5xf32>
    %69 = vector.shape_cast %68 : vector<5xf32> to vector<5x1xf32>
    %70 = tpu.reciprocal %69 {approx = true} : vector<5x1xf32> -> vector<5x1xf32>
    %71 = vector.broadcast %70 : vector<5x1xf32> to vector<5x5xf32>
    %72 = arith.mulf %67, %71 : vector<5x5xf32>
    %73 = arith.truncf %72 : vector<5x5xf32> to vector<5x5xbf16>
    %cst_27 = arith.constant dense<0.000000e+00> : vector<5x8xf32>
    %74 = tpu.matmul %73, %61, %cst_27 {dimension_numbers = #tpu.dot_dimension_numbers<[1], [0], [0], [1], [0, 0, 1, 1], [], []>} : vector<5x5xbf16>, vector<5x8xbf16>, vector<5x8xf32> -> vector<5x8xf32>
    %75 = arith.truncf %74 : vector<5x8xf32> to vector<5x8xbf16>
    %c8 = arith.constant 8 : index
    %c0_28 = arith.constant 0 : index
    %76 = vector.load %arg6[%c8, %c0_28] : memref<32x32xbf16, #tpu.memory_space<vmem>>, vector<8x32xbf16>
    %cst_29 = arith.constant dense<0.000000e+00> : vector<5x32xf32>
    %77 = tpu.matmul %75, %76, %cst_29 {dimension_numbers = #tpu.dot_dimension_numbers<[1], [0], [0], [1], [0, 0, 1, 1], [], []>} : vector<5x8xbf16>, vector<8x32xbf16>, vector<5x32xf32> -> vector<5x32xf32>
    %78 = arith.addf %55, %77 : vector<5x32xf32>
    %79 = vector.extract_strided_slice %29 {offsets = [0, 16], sizes = [5, 8], strides = [1, 1]} : vector<5x96xf32> to vector<5x8xf32>
    %80 = arith.truncf %79 : vector<5x8xf32> to vector<5x8xbf16>
    %81 = vector.extract_strided_slice %29 {offsets = [0, 48], sizes = [5, 8], strides = [1, 1]} : vector<5x96xf32> to vector<5x8xf32>
    %82 = arith.truncf %81 : vector<5x8xf32> to vector<5x8xbf16>
    %83 = vector.extract_strided_slice %29 {offsets = [0, 80], sizes = [5, 8], strides = [1, 1]} : vector<5x96xf32> to vector<5x8xf32>
    %84 = arith.truncf %83 : vector<5x8xf32> to vector<5x8xbf16>
    %cst_30 = arith.constant dense<0.000000e+00> : vector<5x5xf32>
    %85 = tpu.matmul %80, %82, %cst_30 {dimension_numbers = #tpu.dot_dimension_numbers<[1], [1], [0], [0], [0, 0, 1, 0], [], []>} : vector<5x8xbf16>, vector<5x8xbf16>, vector<5x5xf32> -> vector<5x5xf32>
    %cst_31 = arith.constant dense<0xFF800000> : vector<5xf32>
    %86 = vector.multi_reduction <maximumf>, %85, %cst_31 [1] : vector<5x5xf32> to vector<5xf32>
    %87 = vector.shape_cast %86 : vector<5xf32> to vector<5x1xf32>
    %88 = vector.broadcast %87 : vector<5x1xf32> to vector<5x5xf32>
    %89 = arith.subf %85, %88 : vector<5x5xf32>
    %90 = math.exp %89 : vector<5x5xf32>
    %cst_32 = arith.constant dense<0.000000e+00> : vector<5xf32>
    %91 = vector.multi_reduction <add>, %90, %cst_32 [1] : vector<5x5xf32> to vector<5xf32>
    %92 = vector.shape_cast %91 : vector<5xf32> to vector<5x1xf32>
    %93 = tpu.reciprocal %92 {approx = true} : vector<5x1xf32> -> vector<5x1xf32>
    %94 = vector.broadcast %93 : vector<5x1xf32> to vector<5x5xf32>
    %95 = arith.mulf %90, %94 : vector<5x5xf32>
    %96 = arith.truncf %95 : vector<5x5xf32> to vector<5x5xbf16>
    %cst_33 = arith.constant dense<0.000000e+00> : vector<5x8xf32>
    %97 = tpu.matmul %96, %84, %cst_33 {dimension_numbers = #tpu.dot_dimension_numbers<[1], [0], [0], [1], [0, 0, 1, 1], [], []>} : vector<5x5xbf16>, vector<5x8xbf16>, vector<5x8xf32> -> vector<5x8xf32>
    %98 = arith.truncf %97 : vector<5x8xf32> to vector<5x8xbf16>
    %c16 = arith.constant 16 : index
    %c0_34 = arith.constant 0 : index
    %99 = vector.load %arg6[%c16, %c0_34] : memref<32x32xbf16, #tpu.memory_space<vmem>>, vector<8x32xbf16>
    %cst_35 = arith.constant dense<0.000000e+00> : vector<5x32xf32>
    %100 = tpu.matmul %98, %99, %cst_35 {dimension_numbers = #tpu.dot_dimension_numbers<[1], [0], [0], [1], [0, 0, 1, 1], [], []>} : vector<5x8xbf16>, vector<8x32xbf16>, vector<5x32xf32> -> vector<5x32xf32>
    %101 = arith.addf %78, %100 : vector<5x32xf32>
    %102 = vector.extract_strided_slice %29 {offsets = [0, 24], sizes = [5, 8], strides = [1, 1]} : vector<5x96xf32> to vector<5x8xf32>
    %103 = arith.truncf %102 : vector<5x8xf32> to vector<5x8xbf16>
    %104 = vector.extract_strided_slice %29 {offsets = [0, 56], sizes = [5, 8], strides = [1, 1]} : vector<5x96xf32> to vector<5x8xf32>
    %105 = arith.truncf %104 : vector<5x8xf32> to vector<5x8xbf16>
    %106 = vector.extract_strided_slice %29 {offsets = [0, 88], sizes = [5, 8], strides = [1, 1]} : vector<5x96xf32> to vector<5x8xf32>
    %107 = arith.truncf %106 : vector<5x8xf32> to vector<5x8xbf16>
    %cst_36 = arith.constant dense<0.000000e+00> : vector<5x5xf32>
    %108 = tpu.matmul %103, %105, %cst_36 {dimension_numbers = #tpu.dot_dimension_numbers<[1], [1], [0], [0], [0, 0, 1, 0], [], []>} : vector<5x8xbf16>, vector<5x8xbf16>, vector<5x5xf32> -> vector<5x5xf32>
    %cst_37 = arith.constant dense<0xFF800000> : vector<5xf32>
    %109 = vector.multi_reduction <maximumf>, %108, %cst_37 [1] : vector<5x5xf32> to vector<5xf32>
    %110 = vector.shape_cast %109 : vector<5xf32> to vector<5x1xf32>
    %111 = vector.broadcast %110 : vector<5x1xf32> to vector<5x5xf32>
    %112 = arith.subf %108, %111 : vector<5x5xf32>
    %113 = math.exp %112 : vector<5x5xf32>
    %cst_38 = arith.constant dense<0.000000e+00> : vector<5xf32>
    %114 = vector.multi_reduction <add>, %113, %cst_38 [1] : vector<5x5xf32> to vector<5xf32>
    %115 = vector.shape_cast %114 : vector<5xf32> to vector<5x1xf32>
    %116 = tpu.reciprocal %115 {approx = true} : vector<5x1xf32> -> vector<5x1xf32>
    %117 = vector.broadcast %116 : vector<5x1xf32> to vector<5x5xf32>
    %118 = arith.mulf %113, %117 : vector<5x5xf32>
    %119 = arith.truncf %118 : vector<5x5xf32> to vector<5x5xbf16>
    %cst_39 = arith.constant dense<0.000000e+00> : vector<5x8xf32>
    %120 = tpu.matmul %119, %107, %cst_39 {dimension_numbers = #tpu.dot_dimension_numbers<[1], [0], [0], [1], [0, 0, 1, 1], [], []>} : vector<5x5xbf16>, vector<5x8xbf16>, vector<5x8xf32> -> vector<5x8xf32>
    %121 = arith.truncf %120 : vector<5x8xf32> to vector<5x8xbf16>
    %c24 = arith.constant 24 : index
    %c0_40 = arith.constant 0 : index
    %122 = vector.load %arg6[%c24, %c0_40] : memref<32x32xbf16, #tpu.memory_space<vmem>>, vector<8x32xbf16>
    %cst_41 = arith.constant dense<0.000000e+00> : vector<5x32xf32>
    %123 = tpu.matmul %121, %122, %cst_41 {dimension_numbers = #tpu.dot_dimension_numbers<[1], [0], [0], [1], [0, 0, 1, 1], [], []>} : vector<5x8xbf16>, vector<8x32xbf16>, vector<5x32xf32> -> vector<5x32xf32>
    %124 = arith.addf %101, %123 : vector<5x32xf32>
    %c0_42 = arith.constant 0 : index
    %c0_43 = arith.constant 0 : index
    %c0_44 = arith.constant 0 : index
    %125 = vector.load %arg8[%c0_42, %c0_43, %c0_44] : memref<1x5x32xf32, #tpu.memory_space<vmem>>, vector<1x5x32xf32>
    %126 = vector.shape_cast %125 : vector<1x5x32xf32> to vector<5x32xf32>
    %127 = vector.shape_cast %124 : vector<5x32xf32> to vector<1x5x32xf32>
    tpu.vector_store %arg8[%c0_42, %c0_43, %c0_44], %127 {strides = array<i32>} : memref<1x5x32xf32, #tpu.memory_space<vmem>>, vector<1x5x32xf32>,
    return
  }
  func.func @transform_0(%arg0: i32) -> (i32, i32, i32) {
    %c0_i32 = arith.constant 0 : i32
    %c0_i32_0 = arith.constant 0 : i32
    %c0_i32_1 = arith.constant 0 : i32
    return %arg0, %c0_i32, %c0_i32_0 : i32, i32, i32
  }
  func.func @transform_1(%arg0: i32) -> (i32, i32) {
    %c0_i32 = arith.constant 0 : i32
    %c0_i32_0 = arith.constant 0 : i32
    %c0_i32_1 = arith.constant 0 : i32
    return %c0_i32, %c0_i32_0 : i32, i32
  }
  func.func @transform_2(%arg0: i32) -> (i32, i32) {
    %c0_i32 = arith.constant 0 : i32
    %c0_i32_0 = arith.constant 0 : i32
    %c0_i32_1 = arith.constant 0 : i32
    return %c0_i32, %c0_i32_0 : i32, i32
  }
  func.func @transform_3(%arg0: i32) -> (i32, i32) {
    %c0_i32 = arith.constant 0 : i32
    %c0_i32_0 = arith.constant 0 : i32
    %c0_i32_1 = arith.constant 0 : i32
    return %c0_i32, %c0_i32_0 : i32, i32
  }
  func.func @transform_4(%arg0: i32) -> (i32, i32) {
    %c0_i32 = arith.constant 0 : i32
    %c0_i32_0 = arith.constant 0 : i32
    %c0_i32_1 = arith.constant 0 : i32
    return %c0_i32, %c0_i32_0 : i32, i32
  }
  func.func @transform_5(%arg0: i32) -> (i32, i32) {
    %c0_i32 = arith.constant 0 : i32
    %c0_i32_0 = arith.constant 0 : i32
    %c0_i32_1 = arith.constant 0 : i32
    return %c0_i32, %c0_i32_0 : i32, i32
  }
  func.func @transform_6(%arg0: i32) -> (i32, i32) {
    %c0_i32 = arith.constant 0 : i32
    %c0_i32_0 = arith.constant 0 : i32
    %c0_i32_1 = arith.constant 0 : i32
    return %c0_i32, %c0_i32_0 : i32, i32
  }
  func.func @transform_7(%arg0: i32) -> (i32, i32, i32) {
    %c0_i32 = arith.constant 0 : i32
    %c0_i32_0 = arith.constant 0 : i32
    %c0_i32_1 = arith.constant 0 : i32
    return %arg0, %c0_i32, %c0_i32_0 : i32, i32, i32
  }
}

module attributes {stable_mosaic.version = 11 : i64} {
  func.func @_matmul_kernel(%arg0: i32, %arg1: memref<8x192xf32, #tpu.memory_space<vmem>>, %arg2: memref<192x32xbf16, #tpu.memory_space<vmem>>, %arg3: memref<8x32xf32, #tpu.memory_space<vmem>>) attributes {dimension_semantics = [#tpu.dimension_semantics<parallel>], iteration_bounds = array<i64: 1>, scalar_prefetch = 0 : i64, scratch_operands = 0 : i64, tpu.core_type = #tpu.core_type<tc>, window_params = [{transform_indices = @transform_0, window_bounds = array<i64: 8, 192>}, {pipeline_mode = #tpu.pipeline_mode<synchronous>, transform_indices = @transform_1, window_bounds = array<i64: 192, 32>}, {transform_indices = @transform_2, window_bounds = array<i64: 8, 32>}]} {
    %c0 = arith.constant 0 : index
    %c0_0 = arith.constant 0 : index
    %0 = vector.load %arg1[%c0, %c0_0] : memref<8x192xf32, #tpu.memory_space<vmem>>, vector<8x192xf32>
    %1 = arith.truncf %0 : vector<8x192xf32> to vector<8x192xbf16>
    %c0_1 = arith.constant 0 : index
    %c0_2 = arith.constant 0 : index
    %2 = vector.load %arg2[%c0_1, %c0_2] : memref<192x32xbf16, #tpu.memory_space<vmem>>, vector<192x32xbf16>
    %cst = arith.constant dense<0.000000e+00> : vector<8x32xf32>
    %3 = tpu.matmul %1, %2, %cst {dimension_numbers = #tpu.dot_dimension_numbers<[1], [0], [0], [1], [0, 0, 1, 1], [], []>} : vector<8x192xbf16>, vector<192x32xbf16>, vector<8x32xf32> -> vector<8x32xf32>
    %c0_3 = arith.constant 0 : index
    %c0_4 = arith.constant 0 : index
    %4 = vector.load %arg3[%c0_3, %c0_4] : memref<8x32xf32, #tpu.memory_space<vmem>>, vector<8x32xf32>
    tpu.vector_store %arg3[%c0_3, %c0_4], %3 {strides = array<i32>} : memref<8x32xf32, #tpu.memory_space<vmem>>, vector<8x32xf32>,
    return
  }
  func.func @transform_0(%arg0: i32) -> (i32, i32) {
    %c0_i32 = arith.constant 0 : i32
    %c0_i32_0 = arith.constant 0 : i32
    return %arg0, %c0_i32 : i32, i32
  }
  func.func @transform_1(%arg0: i32) -> (i32, i32) {
    %c0_i32 = arith.constant 0 : i32
    %c0_i32_0 = arith.constant 0 : i32
    %c0_i32_1 = arith.constant 0 : i32
    return %c0_i32, %c0_i32_0 : i32, i32
  }
  func.func @transform_2(%arg0: i32) -> (i32, i32) {
    %c0_i32 = arith.constant 0 : i32
    %c0_i32_0 = arith.constant 0 : i32
    return %arg0, %c0_i32 : i32, i32
  }
}

module attributes {stable_mosaic.version = 11 : i64} {
  func.func @_ln_mlp_kernel(%arg0: i32, %arg1: memref<10x32xf32, #tpu.memory_space<vmem>>, %arg2: memref<1x32xf32, #tpu.memory_space<vmem>>, %arg3: memref<1x32xf32, #tpu.memory_space<vmem>>, %arg4: memref<32x64xbf16, #tpu.memory_space<vmem>>, %arg5: memref<1x64xf32, #tpu.memory_space<vmem>>, %arg6: memref<64x32xbf16, #tpu.memory_space<vmem>>, %arg7: memref<1x32xf32, #tpu.memory_space<vmem>>, %arg8: memref<10x32xf32, #tpu.memory_space<vmem>>) attributes {dimension_semantics = [#tpu.dimension_semantics<parallel>], iteration_bounds = array<i64: 1>, scalar_prefetch = 0 : i64, scratch_operands = 0 : i64, tpu.core_type = #tpu.core_type<tc>, window_params = [{transform_indices = @transform_0, window_bounds = array<i64: 10, 32>}, {pipeline_mode = #tpu.pipeline_mode<synchronous>, transform_indices = @transform_1, window_bounds = array<i64: 1, 32>}, {pipeline_mode = #tpu.pipeline_mode<synchronous>, transform_indices = @transform_2, window_bounds = array<i64: 1, 32>}, {pipeline_mode = #tpu.pipeline_mode<synchronous>, transform_indices = @transform_3, window_bounds = array<i64: 32, 64>}, {pipeline_mode = #tpu.pipeline_mode<synchronous>, transform_indices = @transform_4, window_bounds = array<i64: 1, 64>}, {pipeline_mode = #tpu.pipeline_mode<synchronous>, transform_indices = @transform_5, window_bounds = array<i64: 64, 32>}, {pipeline_mode = #tpu.pipeline_mode<synchronous>, transform_indices = @transform_6, window_bounds = array<i64: 1, 32>}, {transform_indices = @transform_7, window_bounds = array<i64: 10, 32>}]} {
    %c0 = arith.constant 0 : index
    %c0_0 = arith.constant 0 : index
    %0 = vector.load %arg1[%c0, %c0_0] : memref<10x32xf32, #tpu.memory_space<vmem>>, vector<10x32xf32>
    %c0_1 = arith.constant 0 : index
    %c0_2 = arith.constant 0 : index
    %1 = vector.load %arg2[%c0_1, %c0_2] : memref<1x32xf32, #tpu.memory_space<vmem>>, vector<1x32xf32>
    %c0_3 = arith.constant 0 : index
    %c0_4 = arith.constant 0 : index
    %2 = vector.load %arg3[%c0_3, %c0_4] : memref<1x32xf32, #tpu.memory_space<vmem>>, vector<1x32xf32>
    %cst = arith.constant dense<0.000000e+00> : vector<10xf32>
    %3 = vector.multi_reduction <add>, %0, %cst [1] : vector<10x32xf32> to vector<10xf32>
    %4 = vector.shape_cast %3 : vector<10xf32> to vector<10x1xf32>
    %cst_5 = arith.constant 3.200000e+01 : f32
    %5 = vector.broadcast %cst_5 : f32 to vector<10x1xf32>
    %6 = arith.divf %4, %5 : vector<10x1xf32>
    %7 = vector.broadcast %6 : vector<10x1xf32> to vector<10x32xf32>
    %8 = arith.subf %0, %7 : vector<10x32xf32>
    %9 = arith.mulf %8, %8 : vector<10x32xf32>
    %cst_6 = arith.constant dense<0.000000e+00> : vector<10xf32>
    %10 = vector.multi_reduction <add>, %9, %cst_6 [1] : vector<10x32xf32> to vector<10xf32>
    %11 = vector.shape_cast %10 : vector<10xf32> to vector<10x1xf32>
    %cst_7 = arith.constant 3.200000e+01 : f32
    %12 = vector.broadcast %cst_7 : f32 to vector<10x1xf32>
    %13 = arith.divf %11, %12 : vector<10x1xf32>
    %cst_8 = arith.constant 9.99999974E-6 : f32
    %14 = vector.broadcast %cst_8 : f32 to vector<10x1xf32>
    %15 = arith.addf %13, %14 : vector<10x1xf32>
    %16 = math.rsqrt %15 : vector<10x1xf32>
    %17 = vector.broadcast %16 : vector<10x1xf32> to vector<10x32xf32>
    %18 = arith.mulf %8, %17 : vector<10x32xf32>
    %19 = vector.broadcast %1 : vector<1x32xf32> to vector<10x32xf32>
    %20 = arith.mulf %18, %19 : vector<10x32xf32>
    %21 = vector.broadcast %2 : vector<1x32xf32> to vector<10x32xf32>
    %22 = arith.addf %20, %21 : vector<10x32xf32>
    %23 = arith.truncf %22 : vector<10x32xf32> to vector<10x32xbf16>
    %c0_9 = arith.constant 0 : index
    %c0_10 = arith.constant 0 : index
    %24 = vector.load %arg7[%c0_9, %c0_10] : memref<1x32xf32, #tpu.memory_space<vmem>>, vector<1x32xf32>
    %25 = vector.broadcast %24 : vector<1x32xf32> to vector<10x32xf32>
    %26 = arith.addf %0, %25 : vector<10x32xf32>
    %c0_11 = arith.constant 0 : index
    %c0_12 = arith.constant 0 : index
    %27 = vector.load %arg4[%c0_11, %c0_12] : memref<32x64xbf16, #tpu.memory_space<vmem>>, vector<32x64xbf16>
    %cst_13 = arith.constant dense<0.000000e+00> : vector<10x64xf32>
    %28 = tpu.matmul %23, %27, %cst_13 {dimension_numbers = #tpu.dot_dimension_numbers<[1], [0], [0], [1], [0, 0, 1, 1], [], []>} : vector<10x32xbf16>, vector<32x64xbf16>, vector<10x64xf32> -> vector<10x64xf32>
    %c0_14 = arith.constant 0 : index
    %c0_15 = arith.constant 0 : index
    %29 = vector.load %arg5[%c0_14, %c0_15] : memref<1x64xf32, #tpu.memory_space<vmem>>, vector<1x64xf32>
    %30 = vector.broadcast %29 : vector<1x64xf32> to vector<10x64xf32>
    %31 = arith.addf %28, %30 : vector<10x64xf32>
    %cst_16 = arith.constant -1.702000e+00 : f32
    %32 = vector.broadcast %cst_16 : f32 to vector<10x64xf32>
    %33 = arith.mulf %32, %31 : vector<10x64xf32>
    %34 = math.exp %33 : vector<10x64xf32>
    %cst_17 = arith.constant 1.000000e+00 : f32
    %35 = vector.broadcast %cst_17 : f32 to vector<10x64xf32>
    %36 = arith.addf %35, %34 : vector<10x64xf32>
    %cst_18 = arith.constant 1.000000e+00 : f32
    %37 = vector.broadcast %cst_18 : f32 to vector<10x64xf32>
    %38 = arith.divf %37, %36 : vector<10x64xf32>
    %39 = arith.mulf %31, %38 : vector<10x64xf32>
    %40 = arith.truncf %39 : vector<10x64xf32> to vector<10x64xbf16>
    %c0_19 = arith.constant 0 : index
    %c0_20 = arith.constant 0 : index
    %41 = vector.load %arg6[%c0_19, %c0_20] : memref<64x32xbf16, #tpu.memory_space<vmem>>, vector<64x32xbf16>
    %cst_21 = arith.constant dense<0.000000e+00> : vector<10x32xf32>
    %42 = tpu.matmul %40, %41, %cst_21 {dimension_numbers = #tpu.dot_dimension_numbers<[1], [0], [0], [1], [0, 0, 1, 1], [], []>} : vector<10x64xbf16>, vector<64x32xbf16>, vector<10x32xf32> -> vector<10x32xf32>
    %43 = arith.addf %26, %42 : vector<10x32xf32>
    %c0_22 = arith.constant 0 : index
    %c0_23 = arith.constant 0 : index
    %44 = vector.load %arg8[%c0_22, %c0_23] : memref<10x32xf32, #tpu.memory_space<vmem>>, vector<10x32xf32>
    tpu.vector_store %arg8[%c0_22, %c0_23], %43 {strides = array<i32>} : memref<10x32xf32, #tpu.memory_space<vmem>>, vector<10x32xf32>,
    return
  }
  func.func @transform_0(%arg0: i32) -> (i32, i32) {
    %c0_i32 = arith.constant 0 : i32
    %c0_i32_0 = arith.constant 0 : i32
    return %arg0, %c0_i32 : i32, i32
  }
  func.func @transform_1(%arg0: i32) -> (i32, i32) {
    %c0_i32 = arith.constant 0 : i32
    %c0_i32_0 = arith.constant 0 : i32
    %c0_i32_1 = arith.constant 0 : i32
    return %c0_i32, %c0_i32_0 : i32, i32
  }
  func.func @transform_2(%arg0: i32) -> (i32, i32) {
    %c0_i32 = arith.constant 0 : i32
    %c0_i32_0 = arith.constant 0 : i32
    %c0_i32_1 = arith.constant 0 : i32
    return %c0_i32, %c0_i32_0 : i32, i32
  }
  func.func @transform_3(%arg0: i32) -> (i32, i32) {
    %c0_i32 = arith.constant 0 : i32
    %c0_i32_0 = arith.constant 0 : i32
    %c0_i32_1 = arith.constant 0 : i32
    return %c0_i32, %c0_i32_0 : i32, i32
  }
  func.func @transform_4(%arg0: i32) -> (i32, i32) {
    %c0_i32 = arith.constant 0 : i32
    %c0_i32_0 = arith.constant 0 : i32
    %c0_i32_1 = arith.constant 0 : i32
    return %c0_i32, %c0_i32_0 : i32, i32
  }
  func.func @transform_5(%arg0: i32) -> (i32, i32) {
    %c0_i32 = arith.constant 0 : i32
    %c0_i32_0 = arith.constant 0 : i32
    %c0_i32_1 = arith.constant 0 : i32
    return %c0_i32, %c0_i32_0 : i32, i32
  }
  func.func @transform_6(%arg0: i32) -> (i32, i32) {
    %c0_i32 = arith.constant 0 : i32
    %c0_i32_0 = arith.constant 0 : i32
    %c0_i32_1 = arith.constant 0 : i32
    return %c0_i32, %c0_i32_0 : i32, i32
  }
  func.func @transform_7(%arg0: i32) -> (i32, i32) {
    %c0_i32 = arith.constant 0 : i32
    %c0_i32_0 = arith.constant 0 : i32
    return %arg0, %c0_i32 : i32, i32
  }
}

module attributes {stable_mosaic.version = 11 : i64} {
  func.func @_ln_head_kernel(%arg0: memref<2x32xf32, #tpu.memory_space<vmem>>, %arg1: memref<1x32xf32, #tpu.memory_space<vmem>>, %arg2: memref<1x32xf32, #tpu.memory_space<vmem>>, %arg3: memref<32x128xbf16, #tpu.memory_space<vmem>>, %arg4: memref<1x128xf32, #tpu.memory_space<vmem>>, %arg5: memref<2x128xf32, #tpu.memory_space<vmem>>) attributes {dimension_semantics = [], scalar_prefetch = 0 : i64, scratch_operands = 0 : i64, tpu.core_type = #tpu.core_type<tc>} {
    %c0 = arith.constant 0 : index
    %c0_0 = arith.constant 0 : index
    %0 = vector.load %arg0[%c0, %c0_0] : memref<2x32xf32, #tpu.memory_space<vmem>>, vector<2x32xf32>
    %c0_1 = arith.constant 0 : index
    %c0_2 = arith.constant 0 : index
    %1 = vector.load %arg1[%c0_1, %c0_2] : memref<1x32xf32, #tpu.memory_space<vmem>>, vector<1x32xf32>
    %c0_3 = arith.constant 0 : index
    %c0_4 = arith.constant 0 : index
    %2 = vector.load %arg2[%c0_3, %c0_4] : memref<1x32xf32, #tpu.memory_space<vmem>>, vector<1x32xf32>
    %cst = arith.constant dense<0.000000e+00> : vector<2xf32>
    %3 = vector.multi_reduction <add>, %0, %cst [1] : vector<2x32xf32> to vector<2xf32>
    %4 = vector.shape_cast %3 : vector<2xf32> to vector<2x1xf32>
    %cst_5 = arith.constant 3.200000e+01 : f32
    %5 = vector.broadcast %cst_5 : f32 to vector<2x1xf32>
    %6 = arith.divf %4, %5 : vector<2x1xf32>
    %7 = vector.broadcast %6 : vector<2x1xf32> to vector<2x32xf32>
    %8 = arith.subf %0, %7 : vector<2x32xf32>
    %9 = arith.mulf %8, %8 : vector<2x32xf32>
    %cst_6 = arith.constant dense<0.000000e+00> : vector<2xf32>
    %10 = vector.multi_reduction <add>, %9, %cst_6 [1] : vector<2x32xf32> to vector<2xf32>
    %11 = vector.shape_cast %10 : vector<2xf32> to vector<2x1xf32>
    %cst_7 = arith.constant 3.200000e+01 : f32
    %12 = vector.broadcast %cst_7 : f32 to vector<2x1xf32>
    %13 = arith.divf %11, %12 : vector<2x1xf32>
    %cst_8 = arith.constant 9.99999974E-6 : f32
    %14 = vector.broadcast %cst_8 : f32 to vector<2x1xf32>
    %15 = arith.addf %13, %14 : vector<2x1xf32>
    %16 = math.rsqrt %15 : vector<2x1xf32>
    %17 = vector.broadcast %16 : vector<2x1xf32> to vector<2x32xf32>
    %18 = arith.mulf %8, %17 : vector<2x32xf32>
    %19 = vector.broadcast %1 : vector<1x32xf32> to vector<2x32xf32>
    %20 = arith.mulf %18, %19 : vector<2x32xf32>
    %21 = vector.broadcast %2 : vector<1x32xf32> to vector<2x32xf32>
    %22 = arith.addf %20, %21 : vector<2x32xf32>
    %23 = arith.truncf %22 : vector<2x32xf32> to vector<2x32xbf16>
    %c0_9 = arith.constant 0 : index
    %c0_10 = arith.constant 0 : index
    %24 = vector.load %arg3[%c0_9, %c0_10] : memref<32x128xbf16, #tpu.memory_space<vmem>>, vector<32x128xbf16>
    %cst_11 = arith.constant dense<0.000000e+00> : vector<2x128xf32>
    %25 = tpu.matmul %23, %24, %cst_11 {dimension_numbers = #tpu.dot_dimension_numbers<[1], [0], [0], [1], [0, 0, 1, 1], [], []>} : vector<2x32xbf16>, vector<32x128xbf16>, vector<2x128xf32> -> vector<2x128xf32>
    %c0_12 = arith.constant 0 : index
    %c0_13 = arith.constant 0 : index
    %26 = vector.load %arg4[%c0_12, %c0_13] : memref<1x128xf32, #tpu.memory_space<vmem>>, vector<1x128xf32>
    %27 = vector.broadcast %26 : vector<1x128xf32> to vector<2x128xf32>
    %28 = arith.addf %25, %27 : vector<2x128xf32>
    %c0_14 = arith.constant 0 : index
    %c0_15 = arith.constant 0 : index
    %29 = vector.load %arg5[%c0_14, %c0_15] : memref<2x128xf32, #tpu.memory_space<vmem>>, vector<2x128xf32>
    tpu.vector_store %arg5[%c0_14, %c0_15], %28 {strides = array<i32>} : memref<2x128xf32, #tpu.memory_space<vmem>>, vector<2x128xf32>,
    return
  }
}

</mosaic_0001>

<llo_original>
// kernel: clip_visual_forward.8
$region0: #{clip_visual_forward.8}
  #allocation0 [shape = 'u32[]', space=smem, size = 0x4, offset = 0x4, fixed_abs, tag = 'smem constant byte address 0x4 - core index']
  #allocation1 [shape = 'u32[144,128]{1,0:T(1,128)}', space=vmem, size = 0x12000, scoped, tag = 'internal scratch']
  %s0 = inlined_call_operand.vmem [shape: f32[10,32], index: 0, kind: input, shape index: {}]
  %s1 = inlined_call_operand.vmem [shape: f32[1,32], index: 1, kind: input, shape index: {}]
  %s2 = inlined_call_operand.vmem [shape: f32[1,32], index: 2, kind: input, shape index: {}]
  %s3 = inlined_call_operand.vmem [shape: f32[10,32], index: 3, kind: output, shape index: {}]
  %s4 = sld [smem:[#allocation0]]
  $region22: #{clip_visual_forward.8} parent=0
    _
  %s6 = ssub.s32 1, %s4
  %s7 = scalar_select 0, %s6, %s4
  // Predicated region
  $region2: #{clip_visual_forward.8} parent=0 // pred_check
    _
  $region3: #{clip_visual_forward.8} parent=0 // pred_check_branch
    %9 = sbr.rel (0) target = $region5
  $region4: #{clip_visual_forward.8} parent=0 // pred_region
    _
  $region5: #{clip_visual_forward.8} parent=0 // pred_fallthru
    _
  // Predicated region
  $region6: #{clip_visual_forward.8} parent=0 // pred_check
    _
  $region7: #{clip_visual_forward.8} parent=0 // pred_check_branch
    %11 = sbr.rel (0) target = $region9
  $region8: #{clip_visual_forward.8} parent=0 // pred_region
    _
  $region9: #{clip_visual_forward.8} parent=0 // pred_fallthru
    _
  // Predicated region
  $region10: #{clip_visual_forward.8} parent=0 // pred_check
    _
  $region11: #{clip_visual_forward.8} parent=0 // pred_check_branch
    %13 = sbr.rel (0) target = $region13
  $region12: #{clip_visual_forward.8} parent=0 // pred_region
    _
  $region13: #{clip_visual_forward.8} parent=0 // pred_fallthru
    _
  %v14 = vld [vmem:[%s0] sm:$0xff]
  %v15 = vld [vmem:[%s0 + $0x8] sm:$0x3]
  %v16 = vld [vmem:[%s1] sm:$0x1]
  %v17 = vld [vmem:[%s2] sm:$0x1]
  %vm18 = vcmask 261120
  %v19 = vsel %vm18, %v14, 0.0
  %20 = vadd.xlane.f32.xlu0 %v19
  %v21 = vpop.xlane.xlu0 %20
  %vm22 = vcmask 254976
  %v23 = vsel %vm22, %v15, 0.0
  %24 = vadd.xlane.f32.xlu0 %v23
  %v25 = vpop.xlane.xlu0 %24
  %v26 = vrcp.pop 32.0
  %v27 = vmul.f32 %v21, %v26
  %v28 = vmul.f32 %v25, %v26
  %v29 = vsub.f32 %v14, %v27
  %v30 = vsub.f32 %v15, %v28
  %v31 = vmul.f32 %v29, %v29
  %v32 = vmul.f32 %v30, %v30
  %v33 = vsel %vm18, %v31, 0.0
  %34 = vadd.xlane.f32.xlu0 %v33
  %v35 = vpop.xlane.xlu0 %34
  %v36 = vsel %vm22, %v32, 0.0
  %37 = vadd.xlane.f32.xlu0 %v36
  %v38 = vpop.xlane.xlu0 %37
  %v39 = vmul.f32 %v35, %v26
  %v40 = vmul.f32 %v38, %v26
  %v41 = vadd.f32 %v39, 1e-05
  %v42 = vadd.f32 %v40, 1e-05
  %v43 = vrsqrt.pop %v41
  %v44 = vrsqrt.pop %v42
  %v45 = vmul.f32 %v29, %v43
  %v46 = vmul.f32 %v30, %v44
  %v48 = vlaneseq
  %v49 = vshrl.u32 %v48, 7
  %v50 = vsub.s32 0, %v49
  %v51 = vrot.slane %v16, %v50
  %v53 = vmul.f32 %v45, %v51
  %v54 = vmul.f32 %v46, %v51
  %v56 = vlaneseq
  %v57 = vshrl.u32 %v56, 7
  %v58 = vsub.s32 0, %v57
  %v59 = vrot.slane %v17, %v58
  %v61 = vadd.f32 %v53, %v59
  %v62 = vadd.f32 %v54, %v59
  %63 = vst.msk [vmem:[%s3] sm:$0xff] %vm18, %v61
  %64 = vst.msk [vmem:[%s3 + $0x8] sm:$0x3] %vm22, %v62
  // Predicated region
  $region14: #{clip_visual_forward.8} parent=0 // pred_check
    _
  $region15: #{clip_visual_forward.8} parent=0 // pred_check_branch
    %66 = sbr.rel (0) target = $region17
  $region16: #{clip_visual_forward.8} parent=0 // pred_region
    _
  $region17: #{clip_visual_forward.8} parent=0 // pred_fallthru
    _
  // Predicated region
  $region18: #{clip_visual_forward.8} parent=0 // pred_check
    _
  $region19: #{clip_visual_forward.8} parent=0 // pred_check_branch
    %68 = sbr.rel (0) target = $region21
  $region20: #{clip_visual_forward.8} parent=0 // pred_region
    _
  $region21: #{clip_visual_forward.8} parent=0 // pred_fallthru
    _

// kernel: clip_visual_forward.7
$region0: #{clip_visual_forward.7}
  #allocation0 [shape = 'u32[]', space=smem, size = 0x4, offset = 0x4, fixed_abs, tag = 'smem constant byte address 0x4 - core index']
  #allocation1 [shape = 'u32[144,128]{1,0:T(1,128)}', space=vmem, size = 0x12000, scoped, tag = 'internal scratch']
  %s0 = inlined_call_operand.vmem [shape: f32[8,192], index: 0, kind: input, shape index: {}]
  %s1 = inlined_call_operand.vmem [shape: bf16[192,32], index: 1, kind: input, shape index: {}]
  %s2 = inlined_call_operand.vmem [shape: f32[8,32], index: 2, kind: output, shape index: {}]
  %s3 = sld [smem:[#allocation0]]
  $region18: #{clip_visual_forward.7} parent=0
    _
  %s5 = ssub.s32 1, %s3
  %s6 = scalar_select 0, %s5, %s3
  // Predicated region
  $region2: #{clip_visual_forward.7} parent=0 // pred_check
    _
  $region3: #{clip_visual_forward.7} parent=0 // pred_check_branch
    %8 = sbr.rel (0) target = $region5
  $region4: #{clip_visual_forward.7} parent=0 // pred_region
    _
  $region5: #{clip_visual_forward.7} parent=0 // pred_fallthru
    _
  // Predicated region
  $region6: #{clip_visual_forward.7} parent=0 // pred_check
    _
  $region7: #{clip_visual_forward.7} parent=0 // pred_check_branch
    %10 = sbr.rel (0) target = $region9
  $region8: #{clip_visual_forward.7} parent=0 // pred_region
    _
  $region9: #{clip_visual_forward.7} parent=0 // pred_fallthru
    _
  %v12 = vld [vmem:[%s0] sm:$0xff]
  %v13 = vld [vmem:[%s0 + $0x8] sm:$0xff]
  %v14 = vpack.c.bf16 %v12, %v12
  %v15 = vpack.c.bf16 %v13, %v13
  %v16 = vld [vmem:[%s1] sm:$0xf]
  %v17 = vld [vmem:[%s1 + $0x4] sm:$0xf]
  %v18 = vld [vmem:[%s1 + $0x8] sm:$0xf]
  %v19 = vld [vmem:[%s1 + $0xc] sm:$0xf]
  %v20 = vld [vmem:[%s1 + $0x10] sm:$0xf]
  %v21 = vld [vmem:[%s1 + $0x14] sm:$0xf]
  %v22 = vld [vmem:[%s1 + $0x18] sm:$0xf]
  %v23 = vld [vmem:[%s1 + $0x1c] sm:$0xf]
  %v24 = vld [vmem:[%s1 + $0x20] sm:$0xf]
  %v25 = vld [vmem:[%s1 + $0x24] sm:$0xf]
  %v26 = vld [vmem:[%s1 + $0x28] sm:$0xf]
  %v27 = vld [vmem:[%s1 + $0x2c] sm:$0xf]
  %v28 = vld [vmem:[%s1 + $0x30] sm:$0xf]
  %v29 = vld [vmem:[%s1 + $0x34] sm:$0xf]
  %v30 = vld [vmem:[%s1 + $0x38] sm:$0xf]
  %v31 = vld [vmem:[%s1 + $0x3c] sm:$0xf]
  %v32 = vld [vmem:[%s1 + $0x40] sm:$0xf]
  %v33 = vld [vmem:[%s1 + $0x44] sm:$0xf]
  %v34 = vld [vmem:[%s1 + $0x48] sm:$0xf]
  %v35 = vld [vmem:[%s1 + $0x4c] sm:$0xf]
  %v36 = vld [vmem:[%s1 + $0x50] sm:$0xf]
  %v37 = vld [vmem:[%s1 + $0x54] sm:$0xf]
  %v38 = vld [vmem:[%s1 + $0x58] sm:$0xf]
  %v39 = vld [vmem:[%s1 + $0x5c] sm:$0xf]
  %v64 = vunpack.c.l.b16 %v16
  %v65 = vunpack.c.l.b16 %v17
  %v66 = vunpack.c.l.b16 %v18
  %v67 = vunpack.c.l.b16 %v19
  %v68 = vunpack.c.l.b16 %v20
  %v69 = vunpack.c.l.b16 %v21
  %v70 = vunpack.c.l.b16 %v22
  %v71 = vunpack.c.l.b16 %v23
  %v72 = vunpack.c.l.b16 %v24
  %v73 = vunpack.c.l.b16 %v25
  %v74 = vunpack.c.l.b16 %v26
  %v75 = vunpack.c.l.b16 %v27
  %v76 = vunpack.c.l.b16 %v28
  %v77 = vunpack.c.l.b16 %v29
  %v78 = vunpack.c.l.b16 %v30
  %v79 = vunpack.c.l.b16 %v31
  %v80 = vunpack.c.l.b16 %v32
  %v81 = vunpack.c.l.b16 %v33
  %v82 = vunpack.c.l.b16 %v34
  %v83 = vunpack.c.l.b16 %v35
  %v84 = vunpack.c.l.b16 %v36
  %v85 = vunpack.c.l.b16 %v37
  %v86 = vunpack.c.l.b16 %v38
  %v87 = vunpack.c.l.b16 %v39
  %v88 = vpack.c.b16 %v65, %v64
  %v89 = vpack.c.b16 %v67, %v66
  %v90 = vpack.c.b16 %v69, %v68
  %v91 = vpack.c.b16 %v71, %v70
  %v92 = vpack.c.b16 %v73, %v72
  %v93 = vpack.c.b16 %v75, %v74
  %v94 = vpack.c.b16 %v77, %v76
  %v95 = vpack.c.b16 %v79, %v78
  %v96 = vpack.c.b16 %v81, %v80
  %v97 = vpack.c.b16 %v83, %v82
  %v98 = vpack.c.b16 %v85, %v84
  %v99 = vpack.c.b16 %v87, %v86
  %vm112 = vcmask 523264
  %v114 = vsel %vm112, %v15, 0
  %116 = vmatprep.subr.bf16.mxu0 0
  %117 = vmatpush1.bf16.msra.mxu0 %v88
  %118 = vmatprep.subr.bf16.mxu0 0
  %119 = vmatpush1.bf16.msra.mxu0 %v89
  %120 = vmatprep.subr.bf16.mxu0 0
  %121 = vmatpush1.bf16.msra.mxu0 %v90
  %122 = vmatprep.subr.bf16.mxu0 0
  %123 = vmatpush1.bf16.msra.mxu0 %v91
  %124 = vmatprep.subr.bf16.mxu0 0
  %125 = vmatpush1.bf16.msra.mxu0 %v92
  %126 = vmatprep.subr.bf16.mxu0 0
  %127 = vmatpush1.bf16.msra.mxu0 %v93
  %128 = vmatprep.subr.bf16.mxu0 0
  %129 = vmatpush1.bf16.msra.mxu0 %v94
  %130 = vmatprep.subr.bf16.mxu0 0
  %131 = vmatpush1.bf16.msra.mxu0 %v95
  %132 = vmatprep.subr.bf16.mxu0 0
  %133 = vmatpush1.bf16.msra.mxu0 %v96
  %134 = vmatprep.subr.bf16.mxu0 0
  %135 = vmatpush1.bf16.msra.mxu0 %v97
  %136 = vmatprep.subr.bf16.mxu0 0
  %137 = vmatpush1.bf16.msra.mxu0 %v98
  %138 = vmatprep.subr.bf16.mxu0 0
  %139 = vmatpush1.bf16.msra.mxu0 %v99
  %140 = vmatprep.subr.bf16.mxu0 0
  %141 = vmatpush1.bf16.msra.mxu0 0
  %142 = vmatprep.subr.bf16.mxu0 0
  %143 = vmatpush1.bf16.msra.mxu0 0
  %144 = vmatprep.subr.bf16.mxu0 0
  %145 = vmatpush1.bf16.msra.mxu0 0
  %146 = vmatprep.subr.bf16.mxu0 0
  %147 = vmatpush1.bf16.msra.mxu0 0
  %148 = vmatprep.mubr.bf16.mxu0 %v114
  %149 = vmatmul.mubr.bf16.gmra.mrb[0].mxu0 %v14
  %v150 = vpop.f32.mrb[0].mxu0
  %v151 = vadd.f32 0.0, %v150
  %v152 = vpop.f32.mrb[0].mxu0
  %v153 = vpop.f32.mrb[0].mxu0
  %v154 = vpop.f32.mrb[0].mxu0
  %155 = vdwg.mxu0
  %vm156 = vcmask 261120
  %157 = vst.msk [vmem:[%s2] sm:$0xff] %vm156, %v151
  // Predicated region
  $region10: #{clip_visual_forward.7} parent=0 // pred_check
    _
  $region11: #{clip_visual_forward.7} parent=0 // pred_check_branch
    %159 = sbr.rel (0) target = $region13
  $region12: #{clip_visual_forward.7} parent=0 // pred_region
    _
  $region13: #{clip_visual_forward.7} parent=0 // pred_fallthru
    _
  // Predicated region
  $region14: #{clip_visual_forward.7} parent=0 // pred_check
    _
  $region15: #{clip_visual_forward.7} parent=0 // pred_check_branch
    %161 = sbr.rel (0) target = $region17
  $region16: #{clip_visual_forward.7} parent=0 // pred_region
    _
  $region17: #{clip_visual_forward.7} parent=0 // pred_fallthru
    _

// kernel: clip_visual_forward.10
$region0: #{clip_visual_forward.10}
  #allocation0 [shape = 'u32[]', space=smem, size = 0x4, offset = 0x4, fixed_abs, tag = 'smem constant byte address 0x4 - core index']
  #allocation1 [shape = 'u32[144,128]{1,0:T(1,128)}', space=vmem, size = 0x12000, scoped, tag = 'internal scratch']
  %s0 = inlined_call_operand.vmem [shape: f32[10,32], index: 0, kind: input, shape index: {}]
  %s1 = inlined_call_operand.vmem [shape: f32[1,32], index: 1, kind: input, shape index: {}]
  %s2 = inlined_call_operand.vmem [shape: f32[1,32], index: 2, kind: input, shape index: {}]
  %s3 = inlined_call_operand.vmem [shape: bf16[32,64], index: 3, kind: input, shape index: {}]
  %s4 = inlined_call_operand.vmem [shape: f32[1,64], index: 4, kind: input, shape index: {}]
  %s5 = inlined_call_operand.vmem [shape: bf16[64,32], index: 5, kind: input, shape index: {}]
  %s6 = inlined_call_operand.vmem [shape: f32[1,32], index: 6, kind: input, shape index: {}]
  %s7 = inlined_call_operand.vmem [shape: f32[10,32], index: 7, kind: output, shape index: {}]
  %s8 = sld [smem:[#allocation0]]
  $region38: #{clip_visual_forward.10} parent=0
    _
  %s10 = ssub.s32 1, %s8
  %s11 = scalar_select 0, %s10, %s8
  // Predicated region
  $region2: #{clip_visual_forward.10} parent=0 // pred_check
    _
  $region3: #{clip_visual_forward.10} parent=0 // pred_check_branch
    %13 = sbr.rel (0) target = $region5
  $region4: #{clip_visual_forward.10} parent=0 // pred_region
    _
  $region5: #{clip_visual_forward.10} parent=0 // pred_fallthru
    _
  // Predicated region
  $region6: #{clip_visual_forward.10} parent=0 // pred_check
    _
  $region7: #{clip_visual_forward.10} parent=0 // pred_check_branch
    %15 = sbr.rel (0) target = $region9
  $region8: #{clip_visual_forward.10} parent=0 // pred_region
    _
  $region9: #{clip_visual_forward.10} parent=0 // pred_fallthru
    _
  // Predicated region
  $region10: #{clip_visual_forward.10} parent=0 // pred_check
    _
  $region11: #{clip_visual_forward.10} parent=0 // pred_check_branch
    %17 = sbr.rel (0) target = $region13
  $region12: #{clip_visual_forward.10} parent=0 // pred_region
    _
  $region13: #{clip_visual_forward.10} parent=0 // pred_fallthru
    _
  // Predicated region
  $region14: #{clip_visual_forward.10} parent=0 // pred_check
    _
  $region15: #{clip_visual_forward.10} parent=0 // pred_check_branch
    %19 = sbr.rel (0) target = $region17
  $region16: #{clip_visual_forward.10} parent=0 // pred_region
    _
  $region17: #{clip_visual_forward.10} parent=0 // pred_fallthru
    _
  // Predicated region
  $region18: #{clip_visual_forward.10} parent=0 // pred_check
    _
  $region19: #{clip_visual_forward.10} parent=0 // pred_check_branch
    %21 = sbr.rel (0) target = $region21
  $region20: #{clip_visual_forward.10} parent=0 // pred_region
    _
  $region21: #{clip_visual_forward.10} parent=0 // pred_fallthru
    _
  // Predicated region
  $region22: #{clip_visual_forward.10} parent=0 // pred_check
    _
  $region23: #{clip_visual_forward.10} parent=0 // pred_check_branch
    %23 = sbr.rel (0) target = $region25
  $region24: #{clip_visual_forward.10} parent=0 // pred_region
    _
  $region25: #{clip_visual_forward.10} parent=0 // pred_fallthru
    _
  // Predicated region
  $region26: #{clip_visual_forward.10} parent=0 // pred_check
    _
  $region27: #{clip_visual_forward.10} parent=0 // pred_check_branch
    %25 = sbr.rel (0) target = $region29
  $region28: #{clip_visual_forward.10} parent=0 // pred_region
    _
  $region29: #{clip_visual_forward.10} parent=0 // pred_fallthru
    _
  %v27 = vld [vmem:[%s0] sm:$0xff]
  %v28 = vld [vmem:[%s0 + $0x8] sm:$0x3]
  %v29 = vld [vmem:[%s1] sm:$0x1]
  %v30 = vld [vmem:[%s2] sm:$0x1]
  %vm31 = vcmask 261120
  %v32 = vsel %vm31, %v27, 0.0
  %33 = vadd.xlane.f32.xlu0 %v32
  %v34 = vpop.xlane.xlu0 %33
  %vm35 = vcmask 254976
  %v36 = vsel %vm35, %v28, 0.0
  %37 = vadd.xlane.f32.xlu0 %v36
  %v38 = vpop.xlane.xlu0 %37
  %v39 = vrcp.pop 32.0
  %v40 = vmul.f32 %v34, %v39
  %v41 = vmul.f32 %v38, %v39
  %v42 = vsub.f32 %v27, %v40
  %v43 = vsub.f32 %v28, %v41
  %v44 = vmul.f32 %v42, %v42
  %v45 = vmul.f32 %v43, %v43
  %v46 = vsel %vm31, %v44, 0.0
  %47 = vadd.xlane.f32.xlu0 %v46
  %v48 = vpop.xlane.xlu0 %47
  %v49 = vsel %vm35, %v45, 0.0
  %50 = vadd.xlane.f32.xlu0 %v49
  %v51 = vpop.xlane.xlu0 %50
  %v52 = vmul.f32 %v48, %v39
  %v53 = vmul.f32 %v51, %v39
  %v54 = vadd.f32 %v52, 1e-05
  %v55 = vadd.f32 %v53, 1e-05
  %v56 = vrsqrt.pop %v54
  %v57 = vrsqrt.pop %v55
  %v58 = vmul.f32 %v42, %v56
  %v59 = vmul.f32 %v43, %v57
  %v61 = vlaneseq
  %v62 = vshrl.u32 %v61, 7
  %v63 = vsub.s32 0, %v62
  %v64 = vrot.slane %v29, %v63
  %v66 = vmul.f32 %v58, %v64
  %v67 = vmul.f32 %v59, %v64
  %v69 = vlaneseq
  %v70 = vshrl.u32 %v69, 7
  %v71 = vsub.s32 0, %v70
  %v72 = vrot.slane %v30, %v71
  %v74 = vadd.f32 %v66, %v72
  %v75 = vadd.f32 %v67, %v72
  %v76 = vpack.c.bf16 %v75, %v74
  %v77 = vld [vmem:[%s6] sm:$0x1]
  %v79 = vlaneseq
  %v80 = vshrl.u32 %v79, 7
  %v81 = vsub.s32 0, %v80
  %v82 = vrot.slane %v77, %v81
  %v84 = vadd.f32 %v27, %v82
  %v85 = vadd.f32 %v28, %v82
  %v86 = vld [vmem:[%s3] sm:$0xf]
  %v87 = vld [vmem:[%s3 + $0x4] sm:$0xf]
  %v88 = vld [vmem:[%s3 + $0x8] sm:$0xf]
  %v89 = vld [vmem:[%s3 + $0xc] sm:$0xf]
  %v90 = vld [vmem:[%s4] sm:$0x1]
  %v92 = vlaneseq
  %v93 = vshrl.u32 %v92, 7
  %v94 = vsub.s32 0, %v93
  %v95 = vrot.slane %v90, %v94
  %v101 = vunpack.c.l.b16 %v86
  %v102 = vunpack.c.l.b16 %v87
  %v103 = vunpack.c.l.b16 %v88
  %v104 = vunpack.c.l.b16 %v89
  %v105 = vpack.c.b16 %v102, %v101
  %v106 = vpack.c.b16 %v104, %v103
  %v110 = vsel %vm31, %v76, 0
  %112 = vmatprep.subr.bf16.mxu0 0
  %113 = vmatpush1.bf16.msra.mxu0 %v105
  %114 = vmatprep.subr.bf16.mxu0 0
  %115 = vmatpush1.bf16.msra.mxu0 %v106
  %116 = vmatprep.subr.bf16.mxu0 0
  %117 = vmatpush1.bf16.msra.mxu0 0
  %118 = vmatprep.subr.bf16.mxu0 0
  %119 = vmatpush1.bf16.msra.mxu0 0
  %120 = vmatprep.subr.bf16.mxu0 0
  %121 = vmatpush1.bf16.msra.mxu0 0
  %122 = vmatprep.subr.bf16.mxu0 0
  %123 = vmatpush1.bf16.msra.mxu0 0
  %124 = vmatprep.subr.bf16.mxu0 0
  %125 = vmatpush1.bf16.msra.mxu0 0
  %126 = vmatprep.subr.bf16.mxu0 0
  %127 = vmatpush1.bf16.msra.mxu0 0
  %128 = vmatprep.subr.bf16.mxu0 0
  %129 = vmatpush1.bf16.msra.mxu0 0
  %130 = vmatprep.subr.bf16.mxu0 0
  %131 = vmatpush1.bf16.msra.mxu0 0
  %132 = vmatprep.subr.bf16.mxu0 0
  %133 = vmatpush1.bf16.msra.mxu0 0
  %134 = vmatprep.subr.bf16.mxu0 0
  %135 = vmatpush1.bf16.msra.mxu0 0
  %136 = vmatprep.subr.bf16.mxu0 0
  %137 = vmatpush1.bf16.msra.mxu0 0
  %138 = vmatprep.subr.bf16.mxu0 0
  %139 = vmatpush1.bf16.msra.mxu0 0
  %140 = vmatprep.subr.bf16.mxu0 0
  %141 = vmatpush1.bf16.msra.mxu0 0
  %142 = vmatprep.subr.bf16.mxu0 0
  %143 = vmatpush1.bf16.msra.mxu0 0
  %144 = vmatprep.mubr.bf16.mxu0 0
  %145 = vmatmul.mubr.bf16.gmra.mrb[0].mxu0 %v110
  %v146 = vpop.f32.mrb[0].mxu0
  %v147 = vadd.f32 %v95, %v146
  %v148 = vpop.f32.mrb[0].mxu0
  %v149 = vpop.f32.mrb[0].mxu0
  %v150 = vadd.f32 %v95, %v149
  %v151 = vpop.f32.mrb[0].mxu0
  %152 = vdwg.mxu0
  %v153 = vmul.f32 %v147, -1.702
  %v154 = vmul.f32 %v150, -1.702
  %v155 = vmul.f32 %v153, 1.442695
  %v156 = vpow.pop %v155
  %v157 = vmul.f32 %v154, 1.442695
  %v158 = vpow.pop %v157
  %v159 = vadd.f32 %v156, 1.0
  %v160 = vadd.f32 %v158, 1.0
  %v161 = vrcp.pop %v159
  %v162 = vmul.f32 1.0, %v161
  %v163 = vrcp.pop %v160
  %v164 = vmul.f32 1.0, %v163
  %v165 = vmul.f32 %v147, %v162
  %v166 = vmul.f32 %v150, %v164
  %v167 = vpack.c.bf16 %v166, %v165
  %v168 = vld [vmem:[%s5] sm:$0xf]
  %v169 = vld [vmem:[%s5 + $0x4] sm:$0xf]
  %v170 = vld [vmem:[%s5 + $0x8] sm:$0xf]
  %v171 = vld [vmem:[%s5 + $0xc] sm:$0xf]
  %v172 = vld [vmem:[%s5 + $0x10] sm:$0xf]
  %v173 = vld [vmem:[%s5 + $0x14] sm:$0xf]
  %v174 = vld [vmem:[%s5 + $0x18] sm:$0xf]
  %v175 = vld [vmem:[%s5 + $0x1c] sm:$0xf]
  %v184 = vunpack.c.l.b16 %v168
  %v185 = vunpack.c.l.b16 %v169
  %v186 = vunpack.c.l.b16 %v170
  %v187 = vunpack.c.l.b16 %v171
  %v188 = vunpack.c.l.b16 %v172
  %v189 = vunpack.c.l.b16 %v173
  %v190 = vunpack.c.l.b16 %v174
  %v191 = vunpack.c.l.b16 %v175
  %v192 = vpack.c.b16 %v185, %v184
  %v193 = vpack.c.b16 %v187, %v186
  %v194 = vpack.c.b16 %v189, %v188
  %v195 = vpack.c.b16 %v191, %v190
  %vm200 = vcmask 523264
  %v202 = vsel %vm200, %v167, 0
  %204 = vmatprep.subr.bf16.mxu0 0
  %205 = vmatpush1.bf16.msra.mxu0 %v192
  %206 = vmatprep.subr.bf16.mxu0 0
  %207 = vmatpush1.bf16.msra.mxu0 %v193
  %208 = vmatprep.subr.bf16.mxu0 0
  %209 = vmatpush1.bf16.msra.mxu0 %v194
  %210 = vmatprep.subr.bf16.mxu0 0
  %211 = vmatpush1.bf16.msra.mxu0 %v195
  %212 = vmatprep.subr.bf16.mxu0 0
  %213 = vmatpush1.bf16.msra.mxu0 0
  %214 = vmatprep.subr.bf16.mxu0 0
  %215 = vmatpush1.bf16.msra.mxu0 0
  %216 = vmatprep.subr.bf16.mxu0 0
  %217 = vmatpush1.bf16.msra.mxu0 0
  %218 = vmatprep.subr.bf16.mxu0 0
  %219 = vmatpush1.bf16.msra.mxu0 0
  %220 = vmatprep.subr.bf16.mxu0 0
  %221 = vmatpush1.bf16.msra.mxu0 0
  %222 = vmatprep.subr.bf16.mxu0 0
  %223 = vmatpush1.bf16.msra.mxu0 0
  %224 = vmatprep.subr.bf16.mxu0 0
  %225 = vmatpush1.bf16.msra.mxu0 0
  %226 = vmatprep.subr.bf16.mxu0 0
  %227 = vmatpush1.bf16.msra.mxu0 0
  %228 = vmatprep.subr.bf16.mxu0 0
  %229 = vmatpush1.bf16.msra.mxu0 0
  %230 = vmatprep.subr.bf16.mxu0 0
  %231 = vmatpush1.bf16.msra.mxu0 0
  %232 = vmatprep.subr.bf16.mxu0 0
  %233 = vmatpush1.bf16.msra.mxu0 0
  %234 = vmatprep.subr.bf16.mxu0 0
  %235 = vmatpush1.bf16.msra.mxu0 0
  %236 = vmatprep.mubr.bf16.mxu0 0
  %237 = vmatmul.mubr.bf16.gmra.mrb[0].mxu0 %v202
  %v238 = vpop.f32.mrb[0].mxu0
  %v239 = vadd.f32 0.0, %v238
  %v240 = vpop.f32.mrb[0].mxu0
  %v241 = vpop.f32.mrb[0].mxu0
  %v242 = vadd.f32 0.0, %v241
  %v243 = vpop.f32.mrb[0].mxu0
  %244 = vdwg.mxu0
  %v245 = vadd.f32 %v84, %v239
  %v246 = vadd.f32 %v85, %v242
  %247 = vst.msk [vmem:[%s7] sm:$0xff] %vm31, %v245
  %248 = vst.msk [vmem:[%s7 + $0x8] sm:$0x3] %vm35, %v246
  // Predicated region
  $region30: #{clip_visual_forward.10} parent=0 // pred_check
    _
  $region31: #{clip_visual_forward.10} parent=0 // pred_check_branch
    %250 = sbr.rel (0) target = $region33
  $region32: #{clip_visual_forward.10} parent=0 // pred_region
    _
  $region33: #{clip_visual_forward.10} parent=0 // pred_fallthru
    _
  // Predicated region
  $region34: #{clip_visual_forward.10} parent=0 // pred_check
    _
  $region35: #{clip_visual_forward.10} parent=0 // pred_check_branch
    %252 = sbr.rel (0) target = $region37
  $region36: #{clip_visual_forward.10} parent=0 // pred_region
    _
  $region37: #{clip_visual_forward.10} parent=0 // pred_fallthru
    _

// kernel: clip_visual_forward.9
$region0: #{clip_visual_forward.9}
  #allocation0 [shape = 'u32[]', space=smem, size = 0x4, offset = 0x4, fixed_abs, tag = 'smem constant byte address 0x4 - core index']
  #allocation1 [shape = 'u32[144,128]{1,0:T(1,128)}', space=vmem, size = 0x12000, scoped, tag = 'internal scratch']
  %s0 = inlined_call_operand.vmem [shape: f32[2,5,32], index: 0, kind: input, shape index: {}]
  %s1 = inlined_call_operand.vmem [shape: f32[1,32], index: 1, kind: input, shape index: {}]
  %s2 = inlined_call_operand.vmem [shape: f32[1,32], index: 2, kind: input, shape index: {}]
  %s3 = inlined_call_operand.vmem [shape: bf16[32,96], index: 3, kind: input, shape index: {}]
  %s4 = inlined_call_operand.vmem [shape: f32[1,96], index: 4, kind: input, shape index: {}]
  %s5 = inlined_call_operand.vmem [shape: bf16[32,32], index: 5, kind: input, shape index: {}]
  %s6 = inlined_call_operand.vmem [shape: f32[1,32], index: 6, kind: input, shape index: {}]
  %s7 = inlined_call_operand.vmem [shape: f32[2,5,32], index: 7, kind: output, shape index: {}]
  %s8 = sld [smem:[#allocation0]]
  $region61: #{clip_visual_forward.9} parent=0
    _
  %s10 = ssub.s32 1, %s8
  %s11 = scalar_select 0, %s10, %s8
  loop: start=0, step=1, limit=4
  $region2: #{clip_visual_forward.9} parent=0 // loop_pre_header
    _
  $region3: #{clip_visual_forward.9} parent=0 // loop_header
    %s13 = sphi 0, %s17
    %p14 = scmp.ge.s32.totalorder %s13, 4
    %s23 = sphi 0, %s25
    %s26 = sphi 0, %s23
    %s27 = sphi 0, %s26
    %s43 = sphi 0, %s27
    %s47 = sphi 0, %s47
    %s49 = sphi 0, %s47
    %s50 = sphi 0, %s49
    %s64 = sphi 0, %s50
    %s68 = sphi 0, %s68
    %s70 = sphi 0, %s68
    %s71 = sphi 0, %s70
    %s85 = sphi 0, %s71
    %s89 = sphi 0, %s89
    %s91 = sphi 0, %s89
    %s92 = sphi 0, %s91
    %s106 = sphi 0, %s92
    %s110 = sphi 0, %s110
    %s112 = sphi 0, %s110
    %s113 = sphi 0, %s112
    %s127 = sphi 0, %s113
    %s131 = sphi 0, %s131
    %s133 = sphi 0, %s131
    %s134 = sphi 0, %s133
    %s148 = sphi 0, %s134
    %s152 = sphi 0, %s152
    %s154 = sphi 0, %s152
    %s155 = sphi 0, %s154
    %s169 = sphi 0, %s155
    %s175 = sphi 0, %s177
    %s178 = sphi 0, %s175
    %s179 = sphi 0, %s178
    %s195 = sphi 0, %s179
  $region4: #{clip_visual_forward.9} parent=0 // loop_header_branch
    %16 = sbr.rel (%p14) target = $region8
  $region5: #{clip_visual_forward.9} parent=0 // loop_body
    %s18 = ssub.s32 %s13, 1
    %s19 = ssub.s32 %s13, 2
    %s20 = sadd.s32 %s13, 1
    %s21 = ssub.s32 %s13, %s20
    %p22 = scmp.eq.s32.totalorder %s21, 0
    %s24 = sadd.s32 %s23, 1
    %s25 = scalar_select %p22, %s23, %s24
    %p28 = pneg %p22
    %p29 = scmp.eq.s32.totalorder %s13, 1
    %p30 = por %p28, %p29
    %p31 = scmp.ne.s32.totalorder %s23, %s26
    %p32 = scmp.eq.s32.totalorder %s13, 0
    %p33 = por %p31, %p32
    %p34 = scmp.ne.s32.totalorder %s23, %s26
    %p35 = scmp.eq.s32.totalorder %s18, 1
    %p36 = por %p34, %p35
    %p37 = scmp.ne.s32.totalorder %s26, %s27
    %p38 = scmp.eq.s32.totalorder %s18, 0
    %p39 = por %p37, %p38
    %p40 = scmp.ne.s32.totalorder %s26, %s27
    %p41 = scmp.eq.s32.totalorder %s19, 1
    %p42 = por %p40, %p41
    %p44 = scmp.ne.s32.totalorder %s27, %s43
    %p45 = scmp.eq.s32.totalorder %s19, 0
    %p46 = por %p44, %p45
    %s48 = sadd.s32 %s47, 1
    %p51 = scmp.eq.s32.totalorder %s13, 1
    %p52 = scmp.ne.s32.totalorder %s47, %s49
    %p53 = scmp.eq.s32.totalorder %s13, 0
    %p54 = por %p52, %p53
    %p55 = scmp.ne.s32.totalorder %s47, %s49
    %p56 = scmp.eq.s32.totalorder %s18, 1
    %p57 = por %p55, %p56
    %p58 = scmp.ne.s32.totalorder %s49, %s50
    %p59 = scmp.eq.s32.totalorder %s18, 0
    %p60 = por %p58, %p59
    %p61 = scmp.ne.s32.totalorder %s49, %s50
    %p62 = scmp.eq.s32.totalorder %s19, 1
    %p63 = por %p61, %p62
    %p65 = scmp.ne.s32.totalorder %s50, %s64
    %p66 = scmp.eq.s32.totalorder %s19, 0
    %p67 = por %p65, %p66
    %s69 = sadd.s32 %s68, 1
    %p72 = scmp.eq.s32.totalorder %s13, 1
    %p73 = scmp.ne.s32.totalorder %s68, %s70
    %p74 = scmp.eq.s32.totalorder %s13, 0
    %p75 = por %p73, %p74
    %p76 = scmp.ne.s32.totalorder %s68, %s70
    %p77 = scmp.eq.s32.totalorder %s18, 1
    %p78 = por %p76, %p77
    %p79 = scmp.ne.s32.totalorder %s70, %s71
    %p80 = scmp.eq.s32.totalorder %s18, 0
    %p81 = por %p79, %p80
    %p82 = scmp.ne.s32.totalorder %s70, %s71
    %p83 = scmp.eq.s32.totalorder %s19, 1
    %p84 = por %p82, %p83
    %p86 = scmp.ne.s32.totalorder %s71, %s85
    %p87 = scmp.eq.s32.totalorder %s19, 0
    %p88 = por %p86, %p87
    %s90 = sadd.s32 %s89, 1
    %p93 = scmp.eq.s32.totalorder %s13, 1
    %p94 = scmp.ne.s32.totalorder %s89, %s91
    %p95 = scmp.eq.s32.totalorder %s13, 0
    %p96 = por %p94, %p95
    %p97 = scmp.ne.s32.totalorder %s89, %s91
    %p98 = scmp.eq.s32.totalorder %s18, 1
    %p99 = por %p97, %p98
    %p100 = scmp.ne.s32.totalorder %s91, %s92
    %p101 = scmp.eq.s32.totalorder %s18, 0
    %p102 = por %p100, %p101
    %p103 = scmp.ne.s32.totalorder %s91, %s92
    %p104 = scmp.eq.s32.totalorder %s19, 1
    %p105 = por %p103, %p104
    %p107 = scmp.ne.s32.totalorder %s92, %s106
    %p108 = scmp.eq.s32.totalorder %s19, 0
    %p109 = por %p107, %p108
    %s111 = sadd.s32 %s110, 1
    %p114 = scmp.eq.s32.totalorder %s13, 1
    %p115 = scmp.ne.s32.totalorder %s110, %s112
    %p116 = scmp.eq.s32.totalorder %s13, 0
    %p117 = por %p115, %p116
    %p118 = scmp.ne.s32.totalorder %s110, %s112
    %p119 = scmp.eq.s32.totalorder %s18, 1
    %p120 = por %p118, %p119
    %p121 = scmp.ne.s32.totalorder %s112, %s113
    %p122 = scmp.eq.s32.totalorder %s18, 0
    %p123 = por %p121, %p122
    %p124 = scmp.ne.s32.totalorder %s112, %s113
    %p125 = scmp.eq.s32.totalorder %s19, 1
    %p126 = por %p124, %p125
    %p128 = scmp.ne.s32.totalorder %s113, %s127
    %p129 = scmp.eq.s32.totalorder %s19, 0
    %p130 = por %p128, %p129
    %s132 = sadd.s32 %s131, 1
    %p135 = scmp.eq.s32.totalorder %s13, 1
    %p136 = scmp.ne.s32.totalorder %s131, %s133
    %p137 = scmp.eq.s32.totalorder %s13, 0
    %p138 = por %p136, %p137
    %p139 = scmp.ne.s32.totalorder %s131, %s133
    %p140 = scmp.eq.s32.totalorder %s18, 1
    %p141 = por %p139, %p140
    %p142 = scmp.ne.s32.totalorder %s133, %s134
    %p143 = scmp.eq.s32.totalorder %s18, 0
    %p144 = por %p142, %p143
    %p145 = scmp.ne.s32.totalorder %s133, %s134
    %p146 = scmp.eq.s32.totalorder %s19, 1
    %p147 = por %p145, %p146
    %p149 = scmp.ne.s32.totalorder %s134, %s148
    %p150 = scmp.eq.s32.totalorder %s19, 0
    %p151 = por %p149, %p150
    %s153 = sadd.s32 %s152, 1
    %p156 = scmp.eq.s32.totalorder %s13, 1
    %p157 = scmp.ne.s32.totalorder %s152, %s154
    %p158 = scmp.eq.s32.totalorder %s13, 0
    %p159 = por %p157, %p158
    %p160 = scmp.ne.s32.totalorder %s152, %s154
    %p161 = scmp.eq.s32.totalorder %s18, 1
    %p162 = por %p160, %p161
    %p163 = scmp.ne.s32.totalorder %s154, %s155
    %p164 = scmp.eq.s32.totalorder %s18, 0
    %p165 = por %p163, %p164
    %p166 = scmp.ne.s32.totalorder %s154, %s155
    %p167 = scmp.eq.s32.totalorder %s19, 1
    %p168 = por %p166, %p167
    %p170 = scmp.ne.s32.totalorder %s155, %s169
    %p171 = scmp.eq.s32.totalorder %s19, 0
    %p172 = por %p170, %p171
    %s173 = ssub.s32 %s13, %s20
    %p174 = scmp.eq.s32.totalorder %s173, 0
    %s176 = sadd.s32 %s175, 1
    %s177 = scalar_select %p174, %s175, %s176
    %p180 = pneg %p174
    %p181 = scmp.eq.s32.totalorder %s13, 1
    %p182 = por %p180, %p181
    %p183 = scmp.ne.s32.totalorder %s175, %s178
    %p184 = scmp.eq.s32.totalorder %s13, 0
    %p185 = por %p183, %p184
    %p186 = scmp.ne.s32.totalorder %s175, %s178
    %p187 = scmp.eq.s32.totalorder %s18, 1
    %p188 = por %p186, %p187
    %p189 = scmp.ne.s32.totalorder %s178, %s179
    %p190 = scmp.eq.s32.totalorder %s18, 0
    %p191 = por %p189, %p190
    %p192 = scmp.ne.s32.totalorder %s178, %s179
    %p193 = scmp.eq.s32.totalorder %s19, 1
    %p194 = por %p192, %p193
    %p196 = scmp.ne.s32.totalorder %s179, %s195
    %p197 = scmp.eq.s32.totalorder %s19, 0
    %p198 = por %p196, %p197
    %p199 = scmp.le.s32.totalorder 1, %s13
    %p200 = scmp.lt.s32.totalorder %s13, 3
    %p201 = pnand %p199, %p200
    %p202 = pneg %p201
    // Predicated region
    $region9: #{clip_visual_forward.9} parent=5 // pred_check
      _
    $region10: #{clip_visual_forward.9} parent=5 // pred_check_branch
      %204 = sbr.rel (%p201) target = $region12
    $region11: #{clip_visual_forward.9} parent=5 // pred_region
      %s205 = ssub.s32 %s13, 1
      // Predicated region
      $region13: #{clip_visual_forward.9} parent=11 // pred_check
        %p206 = pneg %p60
      $region14: #{clip_visual_forward.9} parent=11 // pred_check_branch
        %208 = sbr.rel (%p206) target = $region16
      $region15: #{clip_visual_forward.9} parent=11 // pred_region
        _
      $region16: #{clip_visual_forward.9} parent=11 // pred_fallthru
        _
      // Predicated region
      $region17: #{clip_visual_forward.9} parent=11 // pred_check
        %p209 = pneg %p81
      $region18: #{clip_visual_forward.9} parent=11 // pred_check_branch
        %211 = sbr.rel (%p209) target = $region20
      $region19: #{clip_visual_forward.9} parent=11 // pred_region
        _
      $region20: #{clip_visual_forward.9} parent=11 // pred_fallthru
        _
      // Predicated region
      $region21: #{clip_visual_forward.9} parent=11 // pred_check
        %p212 = pneg %p102
      $region22: #{clip_visual_forward.9} parent=11 // pred_check_branch
        %214 = sbr.rel (%p212) target = $region24
      $region23: #{clip_visual_forward.9} parent=11 // pred_region
        _
      $region24: #{clip_visual_forward.9} parent=11 // pred_fallthru
        _
      // Predicated region
      $region25: #{clip_visual_forward.9} parent=11 // pred_check
        %p215 = pneg %p123
      $region26: #{clip_visual_forward.9} parent=11 // pred_check_branch
        %217 = sbr.rel (%p215) target = $region28
      $region27: #{clip_visual_forward.9} parent=11 // pred_region
        _
      $region28: #{clip_visual_forward.9} parent=11 // pred_fallthru
        _
      // Predicated region
      $region29: #{clip_visual_forward.9} parent=11 // pred_check
        %p218 = pneg %p144
      $region30: #{clip_visual_forward.9} parent=11 // pred_check_branch
        %220 = sbr.rel (%p218) target = $region32
      $region31: #{clip_visual_forward.9} parent=11 // pred_region
        _
      $region32: #{clip_visual_forward.9} parent=11 // pred_fallthru
        _
      // Predicated region
      $region33: #{clip_visual_forward.9} parent=11 // pred_check
        %p221 = pneg %p165
      $region34: #{clip_visual_forward.9} parent=11 // pred_check_branch
        %223 = sbr.rel (%p221) target = $region36
      $region35: #{clip_visual_forward.9} parent=11 // pred_region
        _
      $region36: #{clip_visual_forward.9} parent=11 // pred_fallthru
        _
    $region12: #{clip_visual_forward.9} parent=5 // pred_fallthru
      _
    %p224 = scmp.lt.s32.totalorder %s13, 2
    // Predicated region
    $region37: #{clip_visual_forward.9} parent=5 // pred_check
      %p225 = pneg %p224
    $region38: #{clip_visual_forward.9} parent=5 // pred_check_branch
      %227 = sbr.rel (%p225) target = $region40
    $region39: #{clip_visual_forward.9} parent=5 // pred_region
      // Predicated region
      $region41: #{clip_visual_forward.9} parent=39 // pred_check
        %p228 = pneg %p33
      $region42: #{clip_visual_forward.9} parent=39 // pred_check_branch
        %230 = sbr.rel (%p228) target = $region44
      $region43: #{clip_visual_forward.9} parent=39 // pred_region
        %p231 = scmp.lt.s32.totalorder %s13, 1
        %s232 = scalar_select %p231, %s13, 1
        %s233 = smul.addr %s232, 8
        %s234 = scalar_lea.vmem %s0, %s233
      $region44: #{clip_visual_forward.9} parent=39 // pred_fallthru
        _
    $region40: #{clip_visual_forward.9} parent=5 // pred_fallthru
      _
    %p235 = scmp.le.s32.totalorder 1, %s13
    %p236 = scmp.lt.s32.totalorder %s13, 3
    %p237 = pnand %p235, %p236
    %p238 = pneg %p237
    // Predicated region
    $region45: #{clip_visual_forward.9} parent=5 // pred_check
      _
    $region46: #{clip_visual_forward.9} parent=5 // pred_check_branch
      %240 = sbr.rel (%p237) target = $region48
    $region47: #{clip_visual_forward.9} parent=5 // pred_region
      %s241 = ssub.s32 %s13, 1
      %p242 = scmp.lt.s32.totalorder %s18, 1
      %s243 = scalar_select %p242, %s18, 1
      %s244 = smul.addr %s243, 8
      %s245 = scalar_lea.vmem %s0, %s244
      %p246 = pneg %p39
      %p247 = pneg %p36
      %p248 = pneg %p60
      %p249 = pneg %p57
      %p250 = pneg %p81
      %p251 = pneg %p78
      %p252 = pneg %p102
      %p253 = pneg %p99
      %p254 = pneg %p123
      %p255 = pneg %p120
      %p256 = pneg %p144
      %p257 = pneg %p141
      %p258 = pneg %p165
      %p259 = pneg %p162
      %p260 = pneg %p191
      %p261 = pneg %p188
      %p262 = scmp.lt.s32.totalorder %s18, 1
      %s263 = scalar_select %p262, %s18, 1
      %s264 = smul.addr %s263, 8
      %s265 = scalar_lea.vmem %s7, %s264
      %p266 = scmp.lt.s32.totalorder %s18, 1
      %s267 = scalar_select %p266, %s18, 1
      %s268 = smul.addr %s267, 8
      %s269 = scalar_lea.vmem %s0, %s268
      %p270 = scmp.lt.s32.totalorder %s18, 1
      %s271 = scalar_select %p270, %s18, 1
      %s272 = smul.addr %s271, 8
      %s273 = scalar_lea.vmem %s7, %s272
      %v275 = vld [vmem:[%s269] sm:$0x1f]
      %v276 = vld [vmem:[%s1] sm:$0x1]
      %v277 = vld [vmem:[%s2] sm:$0x1]
      %vm278 = vcmask 258048
      %v279 = vsel %vm278, %v275, 0.0
      %280 = vadd.xlane.f32.xlu0 %v279
      %v281 = vpop.xlane.xlu0 %280
      %v282 = vrcp.pop 32.0
      %v283 = vmul.f32 %v281, %v282
      %v284 = vsub.f32 %v275, %v283
      %v285 = vmul.f32 %v284, %v284
      %v286 = vsel %vm278, %v285, 0.0
      %287 = vadd.xlane.f32.xlu0 %v286
      %v288 = vpop.xlane.xlu0 %287
      %v289 = vmul.f32 %v288, %v282
      %v290 = vadd.f32 %v289, 1e-05
      %v291 = vrsqrt.pop %v290
      %v292 = vmul.f32 %v284, %v291
      %v294 = vlaneseq
      %v295 = vshrl.u32 %v294, 7
      %v296 = vsub.s32 0, %v295
      %v297 = vrot.slane %v276, %v296
      %v299 = vmul.f32 %v292, %v297
      %v301 = vlaneseq
      %v302 = vshrl.u32 %v301, 7
      %v303 = vsub.s32 0, %v302
      %v304 = vrot.slane %v277, %v303
      %v306 = vadd.f32 %v299, %v304
      %v307 = vpack.c.bf16 %v306, %v306
      %v308 = vld [vmem:[%s3] sm:$0xf]
      %v309 = vld [vmem:[%s3 + $0x4] sm:$0xf]
      %v310 = vld [vmem:[%s3 + $0x8] sm:$0xf]
      %v311 = vld [vmem:[%s3 + $0xc] sm:$0xf]
      %v312 = vld [vmem:[%s4] sm:$0x1]
      %v314 = vlaneseq
      %v315 = vshrl.u32 %v314, 7
      %v316 = vsub.s32 0, %v315
      %v317 = vrot.slane %v312, %v316
      %v323 = vunpack.c.l.b16 %v308
      %v324 = vunpack.c.l.b16 %v309
      %v325 = vunpack.c.l.b16 %v310
      %v326 = vunpack.c.l.b16 %v311
      %v327 = vpack.c.b16 %v324, %v323
      %v328 = vpack.c.b16 %v326, %v325
      %vm331 = vcmask 261120
      %v333 = vsel %vm331, %v307, 0
      %335 = vmatprep.subr.bf16.mxu0 0
      %336 = vmatpush1.bf16.msra.mxu0 %v327
      %337 = vmatprep.subr.bf16.mxu0 0
      %338 = vmatpush1.bf16.msra.mxu0 %v328
      %339 = vmatprep.subr.bf16.mxu0 0
      %340 = vmatpush1.bf16.msra.mxu0 0
      %341 = vmatprep.subr.bf16.mxu0 0
      %342 = vmatpush1.bf16.msra.mxu0 0
      %343 = vmatprep.subr.bf16.mxu0 0
      %344 = vmatpush1.bf16.msra.mxu0 0
      %345 = vmatprep.subr.bf16.mxu0 0
      %346 = vmatpush1.bf16.msra.mxu0 0
      %347 = vmatprep.subr.bf16.mxu0 0
      %348 = vmatpush1.bf16.msra.mxu0 0
      %349 = vmatprep.subr.bf16.mxu0 0
      %350 = vmatpush1.bf16.msra.mxu0 0
      %351 = vmatprep.subr.bf16.mxu0 0
      %352 = vmatpush1.bf16.msra.mxu0 0
      %353 = vmatprep.subr.bf16.mxu0 0
      %354 = vmatpush1.bf16.msra.mxu0 0
      %355 = vmatprep.subr.bf16.mxu0 0
      %356 = vmatpush1.bf16.msra.mxu0 0
      %357 = vmatprep.subr.bf16.mxu0 0
      %358 = vmatpush1.bf16.msra.mxu0 0
      %359 = vmatprep.subr.bf16.mxu0 0
      %360 = vmatpush1.bf16.msra.mxu0 0
      %361 = vmatprep.subr.bf16.mxu0 0
      %362 = vmatpush1.bf16.msra.mxu0 0
      %363 = vmatprep.subr.bf16.mxu0 0
      %364 = vmatpush1.bf16.msra.mxu0 0
      %365 = vmatprep.subr.bf16.mxu0 0
      %366 = vmatpush1.bf16.msra.mxu0 0
      %367 = vmatprep.mubr.bf16.mxu0 0
      %368 = vmatmul.mubr.bf16.gmra.mrb[0].mxu0 %v333
      %v369 = vpop.f32.mrb[0].mxu0
      %v370 = vadd.f32 %v317, %v369
      %v371 = vpop.f32.mrb[0].mxu0
      %v372 = vpop.f32.mrb[0].mxu0
      %v373 = vpop.f32.mrb[0].mxu0
      %374 = vdwg.mxu0
      %v375 = vld [vmem:[%s6] sm:$0x1]
      %v377 = vlaneseq
      %v378 = vshrl.u32 %v377, 7
      %v379 = vsub.s32 0, %v378
      %v380 = vrot.slane %v375, %v379
      %v382 = vadd.f32 %v275, %v380
      %v383 = vpack.c.bf16 %v370, %v370
      %385 = vrot.lane.b32.xlu0 %v383, 96
      %v386 = vpop.permute.xlu0 %385
      %vm387 = vcmask 64512
      %v389 = vsel %vm387, %v383, 0
      %v392 = vsel %vm387, %v386, 0
      %394 = vmatprep.subr.bf16.mxu0 0
      %395 = vmatpush1.bf16.xpose.msra.mxu0 %v392
      %396 = vmatprep.subr.bf16.mxu0 0
      %397 = vmatpush1.bf16.xpose.msra.mxu0 0
      %398 = vmatprep.subr.bf16.mxu0 0
      %399 = vmatpush1.bf16.xpose.msra.mxu0 0
      %400 = vmatprep.subr.bf16.mxu0 0
      %401 = vmatpush1.bf16.xpose.msra.mxu0 0
      %402 = vmatprep.subr.bf16.mxu0 0
      %403 = vmatpush1.bf16.xpose.msra.mxu0 0
      %404 = vmatprep.subr.bf16.mxu0 0
      %405 = vmatpush1.bf16.xpose.msra.mxu0 0
      %406 = vmatprep.subr.bf16.mxu0 0
      %407 = vmatpush1.bf16.xpose.msra.mxu0 0
      %408 = vmatprep.subr.bf16.mxu0 0
      %409 = vmatpush1.bf16.xpose.msra.mxu0 0
      %410 = vmatprep.subr.bf16.mxu0 0
      %411 = vmatpush1.bf16.xpose.msra.mxu0 0
      %412 = vmatprep.subr.bf16.mxu0 0
      %413 = vmatpush1.bf16.xpose.msra.mxu0 0
      %414 = vmatprep.subr.bf16.mxu0 0
      %415 = vmatpush1.bf16.xpose.msra.mxu0 0
      %416 = vmatprep.subr.bf16.mxu0 0
      %417 = vmatpush1.bf16.xpose.msra.mxu0 0
      %418 = vmatprep.subr.bf16.mxu0 0
      %419 = vmatpush1.bf16.xpose.msra.mxu0 0
      %420 = vmatprep.subr.bf16.mxu0 0
      %421 = vmatpush1.bf16.xpose.msra.mxu0 0
      %422 = vmatprep.subr.bf16.mxu0 0
      %423 = vmatpush1.bf16.xpose.msra.mxu0 0
      %424 = vmatprep.subr.bf16.mxu0 0
      %425 = vmatpush1.bf16.xpose.msra.mxu0 0
      %426 = vmatprep.mubr.bf16.mxu0 0
      %427 = vmatmul.mubr.bf16.gmra.mrb[0].mxu0 %v389
      %v428 = vpop.f32.mrb[0].mxu0
      %v429 = vadd.f32 0.0, %v428
      %v430 = vpop.f32.mrb[0].mxu0
      %v431 = vpop.f32.mrb[0].mxu0
      %v432 = vpop.f32.mrb[0].mxu0
      %433 = vdwg.mxu0
      %vm434 = vcmask 36864
      %v435 = vsel %vm434, %v429, -inf
      %436 = vmax.xlane.f32.xlu0 %v435
      %v437 = vpop.xlane.xlu0 %436
      %v438 = vsub.f32 %v429, %v437
      %v439 = vmul.f32 %v438, 1.442695
      %v440 = vpow.pop %v439
      %v441 = vsel %vm434, %v440, 0.0
      %442 = vadd.xlane.f32.xlu0 %v441
      %v443 = vpop.xlane.xlu0 %442
      %v444 = vrcp.pop %v443
      %v445 = vmul.f32 %v440, %v444
      %v446 = vpack.c.bf16 %v445, %v445
      %447 = vrot.lane.b32.xlu0 %v383, 64
      %v448 = vpop.permute.xlu0 %447
      %vm449 = vcmask 39936
      %v451 = vsel %vm449, %v446, 0
      %vm453 = vcmask 1041408
      %vm454 = vcmask 1042432
      %v455 = vsel %vm453, 4294967295, 65535
      %v456 = vsel %vm454, %v455, 0
      %v458 = vand.u32 %v448, %v456
      %460 = vmatprep.subr.bf16.mxu0 0
      %461 = vmatpush1.bf16.msra.mxu0 %v458
      %462 = vmatprep.subr.bf16.mxu0 0
      %463 = vmatpush1.bf16.msra.mxu0 0
      %464 = vmatprep.subr.bf16.mxu0 0
      %465 = vmatpush1.bf16.msra.mxu0 0
      %466 = vmatprep.subr.bf16.mxu0 0
      %467 = vmatpush1.bf16.msra.mxu0 0
      %468 = vmatprep.subr.bf16.mxu0 0
      %469 = vmatpush1.bf16.msra.mxu0 0
      %470 = vmatprep.subr.bf16.mxu0 0
      %471 = vmatpush1.bf16.msra.mxu0 0
      %472 = vmatprep.subr.bf16.mxu0 0
      %473 = vmatpush1.bf16.msra.mxu0 0
      %474 = vmatprep.subr.bf16.mxu0 0
      %475 = vmatpush1.bf16.msra.mxu0 0
      %476 = vmatprep.subr.bf16.mxu0 0
      %477 = vmatpush1.bf16.msra.mxu0 0
      %478 = vmatprep.subr.bf16.mxu0 0
      %479 = vmatpush1.bf16.msra.mxu0 0
      %480 = vmatprep.subr.bf16.mxu0 0
      %481 = vmatpush1.bf16.msra.mxu0 0
      %482 = vmatprep.subr.bf16.mxu0 0
      %483 = vmatpush1.bf16.msra.mxu0 0
      %484 = vmatprep.subr.bf16.mxu0 0
      %485 = vmatpush1.bf16.msra.mxu0 0
      %486 = vmatprep.subr.bf16.mxu0 0
      %487 = vmatpush1.bf16.msra.mxu0 0
      %488 = vmatprep.subr.bf16.mxu0 0
      %489 = vmatpush1.bf16.msra.mxu0 0
      %490 = vmatprep.subr.bf16.mxu0 0
      %491 = vmatpush1.bf16.msra.mxu0 0
      %492 = vmatprep.mubr.bf16.mxu0 0
      %493 = vmatmul.mubr.bf16.gmra.mrb[0].mxu0 %v451
      %v494 = vpop.f32.mrb[0].mxu0
      %v495 = vadd.f32 0.0, %v494
      %v496 = vpop.f32.mrb[0].mxu0
      %v497 = vpop.f32.mrb[0].mxu0
      %v498 = vpop.f32.mrb[0].mxu0
      %499 = vdwg.mxu0
      %v500 = vpack.c.bf16 %v495, %v495
      %v501 = vld [vmem:[%s5] sm:$0xf]
      %v503 = vsel %vm387, %v500, 0
      %vm505 = vcmask 1043456
      %v507 = vsel %vm505, %v501, 0
      %509 = vmatprep.subr.bf16.mxu0 0
      %510 = vmatpush1.bf16.msra.mxu0 %v507
      %511 = vmatprep.subr.bf16.mxu0 0
      %512 = vmatpush1.bf16.msra.mxu0 0
      %513 = vmatprep.subr.bf16.mxu0 0
      %514 = vmatpush1.bf16.msra.mxu0 0
      %515 = vmatprep.subr.bf16.mxu0 0
      %516 = vmatpush1.bf16.msra.mxu0 0
      %517 = vmatprep.subr.bf16.mxu0 0
      %518 = vmatpush1.bf16.msra.mxu0 0
      %519 = vmatprep.subr.bf16.mxu0 0
      %520 = vmatpush1.bf16.msra.mxu0 0
      %521 = vmatprep.subr.bf16.mxu0 0
      %522 = vmatpush1.bf16.msra.mxu0 0
      %523 = vmatprep.subr.bf16.mxu0 0
      %524 = vmatpush1.bf16.msra.mxu0 0
      %525 = vmatprep.subr.bf16.mxu0 0
      %526 = vmatpush1.bf16.msra.mxu0 0
      %527 = vmatprep.subr.bf16.mxu0 0
      %528 = vmatpush1.bf16.msra.mxu0 0
      %529 = vmatprep.subr.bf16.mxu0 0
      %530 = vmatpush1.bf16.msra.mxu0 0
      %531 = vmatprep.subr.bf16.mxu0 0
      %532 = vmatpush1.bf16.msra.mxu0 0
      %533 = vmatprep.subr.bf16.mxu0 0
      %534 = vmatpush1.bf16.msra.mxu0 0
      %535 = vmatprep.subr.bf16.mxu0 0
      %536 = vmatpush1.bf16.msra.mxu0 0
      %537 = vmatprep.subr.bf16.mxu0 0
      %538 = vmatpush1.bf16.msra.mxu0 0
      %539 = vmatprep.subr.bf16.mxu0 0
      %540 = vmatpush1.bf16.msra.mxu0 0
      %541 = vmatprep.mubr.bf16.mxu0 0
      %542 = vmatmul.mubr.bf16.gmra.mrb[0].mxu0 %v503
      %v543 = vpop.f32.mrb[0].mxu0
      %v544 = vadd.f32 0.0, %v543
      %v545 = vpop.f32.mrb[0].mxu0
      %v546 = vpop.f32.mrb[0].mxu0
      %v547 = vpop.f32.mrb[0].mxu0
      %548 = vdwg.mxu0
      %v549 = vadd.f32 %v382, %v544
      %550 = vrot.lane.b32.xlu0 %v383, 120
      %v551 = vpop.permute.xlu0 %550
      %552 = vrot.lane.b32.xlu0 %v383, 88
      %v553 = vpop.permute.xlu0 %552
      %v555 = vsel %vm387, %v551, 0
      %v558 = vsel %vm387, %v553, 0
      %560 = vmatprep.subr.bf16.mxu0 0
      %561 = vmatpush1.bf16.xpose.msra.mxu0 %v558
      %562 = vmatprep.subr.bf16.mxu0 0
      %563 = vmatpush1.bf16.xpose.msra.mxu0 0
      %564 = vmatprep.subr.bf16.mxu0 0
      %565 = vmatpush1.bf16.xpose.msra.mxu0 0
      %566 = vmatprep.subr.bf16.mxu0 0
      %567 = vmatpush1.bf16.xpose.msra.mxu0 0
      %568 = vmatprep.subr.bf16.mxu0 0
      %569 = vmatpush1.bf16.xpose.msra.mxu0 0
      %570 = vmatprep.subr.bf16.mxu0 0
      %571 = vmatpush1.bf16.xpose.msra.mxu0 0
      %572 = vmatprep.subr.bf16.mxu0 0
      %573 = vmatpush1.bf16.xpose.msra.mxu0 0
      %574 = vmatprep.subr.bf16.mxu0 0
      %575 = vmatpush1.bf16.xpose.msra.mxu0 0
      %576 = vmatprep.subr.bf16.mxu0 0
      %577 = vmatpush1.bf16.xpose.msra.mxu0 0
      %578 = vmatprep.subr.bf16.mxu0 0
      %579 = vmatpush1.bf16.xpose.msra.mxu0 0
      %580 = vmatprep.subr.bf16.mxu0 0
      %581 = vmatpush1.bf16.xpose.msra.mxu0 0
      %582 = vmatprep.subr.bf16.mxu0 0
      %583 = vmatpush1.bf16.xpose.msra.mxu0 0
      %584 = vmatprep.subr.bf16.mxu0 0
      %585 = vmatpush1.bf16.xpose.msra.mxu0 0
      %586 = vmatprep.subr.bf16.mxu0 0
      %587 = vmatpush1.bf16.xpose.msra.mxu0 0
      %588 = vmatprep.subr.bf16.mxu0 0
      %589 = vmatpush1.bf16.xpose.msra.mxu0 0
      %590 = vmatprep.subr.bf16.mxu0 0
      %591 = vmatpush1.bf16.xpose.msra.mxu0 0
      %592 = vmatprep.mubr.bf16.mxu0 0
      %593 = vmatmul.mubr.bf16.gmra.mrb[0].mxu0 %v555
      %v594 = vpop.f32.mrb[0].mxu0
      %v595 = vadd.f32 0.0, %v594
      %v596 = vpop.f32.mrb[0].mxu0
      %v597 = vpop.f32.mrb[0].mxu0
      %v598 = vpop.f32.mrb[0].mxu0
      %599 = vdwg.mxu0
      %v600 = vsel %vm434, %v595, -inf
      %601 = vmax.xlane.f32.xlu0 %v600
      %v602 = vpop.xlane.xlu0 %601
      %v603 = vsub.f32 %v595, %v602
      %v604 = vmul.f32 %v603, 1.442695
      %v605 = vpow.pop %v604
      %v606 = vsel %vm434, %v605, 0.0
      %607 = vadd.xlane.f32.xlu0 %v606
      %v608 = vpop.xlane.xlu0 %607
      %v609 = vrcp.pop %v608
      %v610 = vmul.f32 %v605, %v609
      %v611 = vpack.c.bf16 %v610, %v610
      %612 = vrot.lane.b32.xlu0 %v383, 56
      %v613 = vpop.permute.xlu0 %612
      %v615 = vsel %vm449, %v611, 0
      %v618 = vand.u32 %v613, %v456
      %620 = vmatprep.subr.bf16.mxu0 0
      %621 = vmatpush1.bf16.msra.mxu0 %v618
      %622 = vmatprep.subr.bf16.mxu0 0
      %623 = vmatpush1.bf16.msra.mxu0 0
      %624 = vmatprep.subr.bf16.mxu0 0
      %625 = vmatpush1.bf16.msra.mxu0 0
      %626 = vmatprep.subr.bf16.mxu0 0
      %627 = vmatpush1.bf16.msra.mxu0 0
      %628 = vmatprep.subr.bf16.mxu0 0
      %629 = vmatpush1.bf16.msra.mxu0 0
      %630 = vmatprep.subr.bf16.mxu0 0
      %631 = vmatpush1.bf16.msra.mxu0 0
      %632 = vmatprep.subr.bf16.mxu0 0
      %633 = vmatpush1.bf16.msra.mxu0 0
      %634 = vmatprep.subr.bf16.mxu0 0
      %635 = vmatpush1.bf16.msra.mxu0 0
      %636 = vmatprep.subr.bf16.mxu0 0
      %637 = vmatpush1.bf16.msra.mxu0 0
      %638 = vmatprep.subr.bf16.mxu0 0
      %639 = vmatpush1.bf16.msra.mxu0 0
      %640 = vmatprep.subr.bf16.mxu0 0
      %641 = vmatpush1.bf16.msra.mxu0 0
      %642 = vmatprep.subr.bf16.mxu0 0
      %643 = vmatpush1.bf16.msra.mxu0 0
      %644 = vmatprep.subr.bf16.mxu0 0
      %645 = vmatpush1.bf16.msra.mxu0 0
      %646 = vmatprep.subr.bf16.mxu0 0
      %647 = vmatpush1.bf16.msra.mxu0 0
      %648 = vmatprep.subr.bf16.mxu0 0
      %649 = vmatpush1.bf16.msra.mxu0 0
      %650 = vmatprep.subr.bf16.mxu0 0
      %651 = vmatpush1.bf16.msra.mxu0 0
      %652 = vmatprep.mubr.bf16.mxu0 0
      %653 = vmatmul.mubr.bf16.gmra.mrb[0].mxu0 %v615
      %v654 = vpop.f32.mrb[0].mxu0
      %v655 = vadd.f32 0.0, %v654
      %v656 = vpop.f32.mrb[0].mxu0
      %v657 = vpop.f32.mrb[0].mxu0
      %v658 = vpop.f32.mrb[0].mxu0
      %659 = vdwg.mxu0
      %v660 = vpack.c.bf16 %v655, %v655
      %v661 = vld [vmem:[%s5 + $0x4] sm:$0xf]
      %v663 = vsel %vm387, %v660, 0
      %v666 = vsel %vm505, %v661, 0
      %668 = vmatprep.subr.bf16.mxu0 0
      %669 = vmatpush1.bf16.msra.mxu0 %v666
      %670 = vmatprep.subr.bf16.mxu0 0
      %671 = vmatpush1.bf16.msra.mxu0 0
      %672 = vmatprep.subr.bf16.mxu0 0
      %673 = vmatpush1.bf16.msra.mxu0 0
      %674 = vmatprep.subr.bf16.mxu0 0
      %675 = vmatpush1.bf16.msra.mxu0 0
      %676 = vmatprep.subr.bf16.mxu0 0
      %677 = vmatpush1.bf16.msra.mxu0 0
      %678 = vmatprep.subr.bf16.mxu0 0
      %679 = vmatpush1.bf16.msra.mxu0 0
      %680 = vmatprep.subr.bf16.mxu0 0
      %681 = vmatpush1.bf16.msra.mxu0 0
      %682 = vmatprep.subr.bf16.mxu0 0
      %683 = vmatpush1.bf16.msra.mxu0 0
      %684 = vmatprep.subr.bf16.mxu0 0
      %685 = vmatpush1.bf16.msra.mxu0 0
      %686 = vmatprep.subr.bf16.mxu0 0
      %687 = vmatpush1.bf16.msra.mxu0 0
      %688 = vmatprep.subr.bf16.mxu0 0
      %689 = vmatpush1.bf16.msra.mxu0 0
      %690 = vmatprep.subr.bf16.mxu0 0
      %691 = vmatpush1.bf16.msra.mxu0 0
      %692 = vmatprep.subr.bf16.mxu0 0
      %693 = vmatpush1.bf16.msra.mxu0 0
      %694 = vmatprep.subr.bf16.mxu0 0
      %695 = vmatpush1.bf16.msra.mxu0 0
      %696 = vmatprep.subr.bf16.mxu0 0
      %697 = vmatpush1.bf16.msra.mxu0 0
      %698 = vmatprep.subr.bf16.mxu0 0
      %699 = vmatpush1.bf16.msra.mxu0 0
      %700 = vmatprep.mubr.bf16.mxu0 0
      %701 = vmatmul.mubr.bf16.gmra.mrb[0].mxu0 %v663
      %v702 = vpop.f32.mrb[0].mxu0
      %v703 = vadd.f32 0.0, %v702
      %v704 = vpop.f32.mrb[0].mxu0
      %v705 = vpop.f32.mrb[0].mxu0
      %v706 = vpop.f32.mrb[0].mxu0
      %707 = vdwg.mxu0
      %v708 = vadd.f32 %v549, %v703
      %709 = vrot.lane.b32.xlu0 %v383, 112
      %v710 = vpop.permute.xlu0 %709
      %711 = vrot.lane.b32.xlu0 %v383, 80
      %v712 = vpop.permute.xlu0 %711
      %v714 = vsel %vm387, %v710, 0
      %v717 = vsel %vm387, %v712, 0
      %719 = vmatprep.subr.bf16.mxu0 0
      %720 = vmatpush1.bf16.xpose.msra.mxu0 %v717
      %721 = vmatprep.subr.bf16.mxu0 0
      %722 = vmatpush1.bf16.xpose.msra.mxu0 0
      %723 = vmatprep.subr.bf16.mxu0 0
      %724 = vmatpush1.bf16.xpose.msra.mxu0 0
      %725 = vmatprep.subr.bf16.mxu0 0
      %726 = vmatpush1.bf16.xpose.msra.mxu0 0
      %727 = vmatprep.subr.bf16.mxu0 0
      %728 = vmatpush1.bf16.xpose.msra.mxu0 0
      %729 = vmatprep.subr.bf16.mxu0 0
      %730 = vmatpush1.bf16.xpose.msra.mxu0 0
      %731 = vmatprep.subr.bf16.mxu0 0
      %732 = vmatpush1.bf16.xpose.msra.mxu0 0
      %733 = vmatprep.subr.bf16.mxu0 0
      %734 = vmatpush1.bf16.xpose.msra.mxu0 0
      %735 = vmatprep.subr.bf16.mxu0 0
      %736 = vmatpush1.bf16.xpose.msra.mxu0 0
      %737 = vmatprep.subr.bf16.mxu0 0
      %738 = vmatpush1.bf16.xpose.msra.mxu0 0
      %739 = vmatprep.subr.bf16.mxu0 0
      %740 = vmatpush1.bf16.xpose.msra.mxu0 0
      %741 = vmatprep.subr.bf16.mxu0 0
      %742 = vmatpush1.bf16.xpose.msra.mxu0 0
      %743 = vmatprep.subr.bf16.mxu0 0
      %744 = vmatpush1.bf16.xpose.msra.mxu0 0
      %745 = vmatprep.subr.bf16.mxu0 0
      %746 = vmatpush1.bf16.xpose.msra.mxu0 0
      %747 = vmatprep.subr.bf16.mxu0 0
      %748 = vmatpush1.bf16.xpose.msra.mxu0 0
      %749 = vmatprep.subr.bf16.mxu0 0
      %750 = vmatpush1.bf16.xpose.msra.mxu0 0
      %751 = vmatprep.mubr.bf16.mxu0 0
      %752 = vmatmul.mubr.bf16.gmra.mrb[0].mxu0 %v714
      %v753 = vpop.f32.mrb[0].mxu0
      %v754 = vadd.f32 0.0, %v753
      %v755 = vpop.f32.mrb[0].mxu0
      %v756 = vpop.f32.mrb[0].mxu0
      %v757 = vpop.f32.mrb[0].mxu0
      %758 = vdwg.mxu0
      %v759 = vsel %vm434, %v754, -inf
      %760 = vmax.xlane.f32.xlu0 %v759
      %v761 = vpop.xlane.xlu0 %760
      %v762 = vsub.f32 %v754, %v761
      %v763 = vmul.f32 %v762, 1.442695
      %v764 = vpow.pop %v763
      %v765 = vsel %vm434, %v764, 0.0
      %766 = vadd.xlane.f32.xlu0 %v765
      %v767 = vpop.xlane.xlu0 %766
      %v768 = vrcp.pop %v767
      %v769 = vmul.f32 %v764, %v768
      %v770 = vpack.c.bf16 %v769, %v769
      %771 = vrot.lane.b32.xlu0 %v383, 48
      %v772 = vpop.permute.xlu0 %771
      %v774 = vsel %vm449, %v770, 0
      %v777 = vand.u32 %v772, %v456
      %779 = vmatprep.subr.bf16.mxu0 0
      %780 = vmatpush1.bf16.msra.mxu0 %v777
      %781 = vmatprep.subr.bf16.mxu0 0
      %782 = vmatpush1.bf16.msra.mxu0 0
      %783 = vmatprep.subr.bf16.mxu0 0
      %784 = vmatpush1.bf16.msra.mxu0 0
      %785 = vmatprep.subr.bf16.mxu0 0
      %786 = vmatpush1.bf16.msra.mxu0 0
      %787 = vmatprep.subr.bf16.mxu0 0
      %788 = vmatpush1.bf16.msra.mxu0 0
      %789 = vmatprep.subr.bf16.mxu0 0
      %790 = vmatpush1.bf16.msra.mxu0 0
      %791 = vmatprep.subr.bf16.mxu0 0
      %792 = vmatpush1.bf16.msra.mxu0 0
      %793 = vmatprep.subr.bf16.mxu0 0
      %794 = vmatpush1.bf16.msra.mxu0 0
      %795 = vmatprep.subr.bf16.mxu0 0
      %796 = vmatpush1.bf16.msra.mxu0 0
      %797 = vmatprep.subr.bf16.mxu0 0
      %798 = vmatpush1.bf16.msra.mxu0 0
      %799 = vmatprep.subr.bf16.mxu0 0
      %800 = vmatpush1.bf16.msra.mxu0 0
      %801 = vmatprep.subr.bf16.mxu0 0
      %802 = vmatpush1.bf16.msra.mxu0 0
      %803 = vmatprep.subr.bf16.mxu0 0
      %804 = vmatpush1.bf16.msra.mxu0 0
      %805 = vmatprep.subr.bf16.mxu0 0
      %806 = vmatpush1.bf16.msra.mxu0 0
      %807 = vmatprep.subr.bf16.mxu0 0
      %808 = vmatpush1.bf16.msra.mxu0 0
      %809 = vmatprep.subr.bf16.mxu0 0
      %810 = vmatpush1.bf16.msra.mxu0 0
      %811 = vmatprep.mubr.bf16.mxu0 0
      %812 = vmatmul.mubr.bf16.gmra.mrb[0].mxu0 %v774
      %v813 = vpop.f32.mrb[0].mxu0
      %v814 = vadd.f32 0.0, %v813
      %v815 = vpop.f32.mrb[0].mxu0
      %v816 = vpop.f32.mrb[0].mxu0
      %v817 = vpop.f32.mrb[0].mxu0
      %818 = vdwg.mxu0
      %v819 = vpack.c.bf16 %v814, %v814
      %v820 = vld [vmem:[%s5 + $0x8] sm:$0xf]
      %v822 = vsel %vm387, %v819, 0
      %v825 = vsel %vm505, %v820, 0
      %827 = vmatprep.subr.bf16.mxu0 0
      %828 = vmatpush1.bf16.msra.mxu0 %v825
      %829 = vmatprep.subr.bf16.mxu0 0
      %830 = vmatpush1.bf16.msra.mxu0 0
      %831 = vmatprep.subr.bf16.mxu0 0
      %832 = vmatpush1.bf16.msra.mxu0 0
      %833 = vmatprep.subr.bf16.mxu0 0
      %834 = vmatpush1.bf16.msra.mxu0 0
      %835 = vmatprep.subr.bf16.mxu0 0
      %836 = vmatpush1.bf16.msra.mxu0 0
      %837 = vmatprep.subr.bf16.mxu0 0
      %838 = vmatpush1.bf16.msra.mxu0 0
      %839 = vmatprep.subr.bf16.mxu0 0
      %840 = vmatpush1.bf16.msra.mxu0 0
      %841 = vmatprep.subr.bf16.mxu0 0
      %842 = vmatpush1.bf16.msra.mxu0 0
      %843 = vmatprep.subr.bf16.mxu0 0
      %844 = vmatpush1.bf16.msra.mxu0 0
      %845 = vmatprep.subr.bf16.mxu0 0
      %846 = vmatpush1.bf16.msra.mxu0 0
      %847 = vmatprep.subr.bf16.mxu0 0
      %848 = vmatpush1.bf16.msra.mxu0 0
      %849 = vmatprep.subr.bf16.mxu0 0
      %850 = vmatpush1.bf16.msra.mxu0 0
      %851 = vmatprep.subr.bf16.mxu0 0
      %852 = vmatpush1.bf16.msra.mxu0 0
      %853 = vmatprep.subr.bf16.mxu0 0
      %854 = vmatpush1.bf16.msra.mxu0 0
      %855 = vmatprep.subr.bf16.mxu0 0
      %856 = vmatpush1.bf16.msra.mxu0 0
      %857 = vmatprep.subr.bf16.mxu0 0
      %858 = vmatpush1.bf16.msra.mxu0 0
      %859 = vmatprep.mubr.bf16.mxu0 0
      %860 = vmatmul.mubr.bf16.gmra.mrb[0].mxu0 %v822
      %v861 = vpop.f32.mrb[0].mxu0
      %v862 = vadd.f32 0.0, %v861
      %v863 = vpop.f32.mrb[0].mxu0
      %v864 = vpop.f32.mrb[0].mxu0
      %v865 = vpop.f32.mrb[0].mxu0
      %866 = vdwg.mxu0
      %v867 = vadd.f32 %v708, %v862
      %868 = vrot.lane.b32.xlu0 %v383, 104
      %v869 = vpop.permute.xlu0 %868
      %870 = vrot.lane.b32.xlu0 %v383, 72
      %v871 = vpop.permute.xlu0 %870
      %v873 = vsel %vm387, %v869, 0
      %v876 = vsel %vm387, %v871, 0
      %878 = vmatprep.subr.bf16.mxu0 0
      %879 = vmatpush1.bf16.xpose.msra.mxu0 %v876
      %880 = vmatprep.subr.bf16.mxu0 0
      %881 = vmatpush1.bf16.xpose.msra.mxu0 0
      %882 = vmatprep.subr.bf16.mxu0 0
      %883 = vmatpush1.bf16.xpose.msra.mxu0 0
      %884 = vmatprep.subr.bf16.mxu0 0
      %885 = vmatpush1.bf16.xpose.msra.mxu0 0
      %886 = vmatprep.subr.bf16.mxu0 0
      %887 = vmatpush1.bf16.xpose.msra.mxu0 0
      %888 = vmatprep.subr.bf16.mxu0 0
      %889 = vmatpush1.bf16.xpose.msra.mxu0 0
      %890 = vmatprep.subr.bf16.mxu0 0
      %891 = vmatpush1.bf16.xpose.msra.mxu0 0
      %892 = vmatprep.subr.bf16.mxu0 0
      %893 = vmatpush1.bf16.xpose.msra.mxu0 0
      %894 = vmatprep.subr.bf16.mxu0 0
      %895 = vmatpush1.bf16.xpose.msra.mxu0 0
      %896 = vmatprep.subr.bf16.mxu0 0
      %897 = vmatpush1.bf16.xpose.msra.mxu0 0
      %898 = vmatprep.subr.bf16.mxu0 0
      %899 = vmatpush1.bf16.xpose.msra.mxu0 0
      %900 = vmatprep.subr.bf16.mxu0 0
      %901 = vmatpush1.bf16.xpose.msra.mxu0 0
      %902 = vmatprep.subr.bf16.mxu0 0
      %903 = vmatpush1.bf16.xpose.msra.mxu0 0
      %904 = vmatprep.subr.bf16.mxu0 0
      %905 = vmatpush1.bf16.xpose.msra.mxu0 0
      %906 = vmatprep.subr.bf16.mxu0 0
      %907 = vmatpush1.bf16.xpose.msra.mxu0 0
      %908 = vmatprep.subr.bf16.mxu0 0
      %909 = vmatpush1.bf16.xpose.msra.mxu0 0
      %910 = vmatprep.mubr.bf16.mxu0 0
      %911 = vmatmul.mubr.bf16.gmra.mrb[0].mxu0 %v873
      %v912 = vpop.f32.mrb[0].mxu0
      %v913 = vadd.f32 0.0, %v912
      %v914 = vpop.f32.mrb[0].mxu0
      %v915 = vpop.f32.mrb[0].mxu0
      %v916 = vpop.f32.mrb[0].mxu0
      %917 = vdwg.mxu0
      %v918 = vsel %vm434, %v913, -inf
      %919 = vmax.xlane.f32.xlu0 %v918
      %v920 = vpop.xlane.xlu0 %919
      %v921 = vsub.f32 %v913, %v920
      %v922 = vmul.f32 %v921, 1.442695
      %v923 = vpow.pop %v922
      %v924 = vsel %vm434, %v923, 0.0
      %925 = vadd.xlane.f32.xlu0 %v924
      %v926 = vpop.xlane.xlu0 %925
      %v927 = vrcp.pop %v926
      %v928 = vmul.f32 %v923, %v927
      %v929 = vpack.c.bf16 %v928, %v928
      %930 = vrot.lane.b32.xlu0 %v383, 40
      %v931 = vpop.permute.xlu0 %930
      %v933 = vsel %vm449, %v929, 0
      %v936 = vand.u32 %v931, %v456
      %938 = vmatprep.subr.bf16.mxu0 0
      %939 = vmatpush1.bf16.msra.mxu0 %v936
      %940 = vmatprep.subr.bf16.mxu0 0
      %941 = vmatpush1.bf16.msra.mxu0 0
      %942 = vmatprep.subr.bf16.mxu0 0
      %943 = vmatpush1.bf16.msra.mxu0 0
      %944 = vmatprep.subr.bf16.mxu0 0
      %945 = vmatpush1.bf16.msra.mxu0 0
      %946 = vmatprep.subr.bf16.mxu0 0
      %947 = vmatpush1.bf16.msra.mxu0 0
      %948 = vmatprep.subr.bf16.mxu0 0
      %949 = vmatpush1.bf16.msra.mxu0 0
      %950 = vmatprep.subr.bf16.mxu0 0
      %951 = vmatpush1.bf16.msra.mxu0 0
      %952 = vmatprep.subr.bf16.mxu0 0
      %953 = vmatpush1.bf16.msra.mxu0 0
      %954 = vmatprep.subr.bf16.mxu0 0
      %955 = vmatpush1.bf16.msra.mxu0 0
      %956 = vmatprep.subr.bf16.mxu0 0
      %957 = vmatpush1.bf16.msra.mxu0 0
      %958 = vmatprep.subr.bf16.mxu0 0
      %959 = vmatpush1.bf16.msra.mxu0 0
      %960 = vmatprep.subr.bf16.mxu0 0
      %961 = vmatpush1.bf16.msra.mxu0 0
      %962 = vmatprep.subr.bf16.mxu0 0
      %963 = vmatpush1.bf16.msra.mxu0 0
      %964 = vmatprep.subr.bf16.mxu0 0
      %965 = vmatpush1.bf16.msra.mxu0 0
      %966 = vmatprep.subr.bf16.mxu0 0
      %967 = vmatpush1.bf16.msra.mxu0 0
      %968 = vmatprep.subr.bf16.mxu0 0
      %969 = vmatpush1.bf16.msra.mxu0 0
      %970 = vmatprep.mubr.bf16.mxu0 0
      %971 = vmatmul.mubr.bf16.gmra.mrb[0].mxu0 %v933
      %v972 = vpop.f32.mrb[0].mxu0
      %v973 = vadd.f32 0.0, %v972
      %v974 = vpop.f32.mrb[0].mxu0
      %v975 = vpop.f32.mrb[0].mxu0
      %v976 = vpop.f32.mrb[0].mxu0
      %977 = vdwg.mxu0
      %v978 = vpack.c.bf16 %v973, %v973
      %v979 = vld [vmem:[%s5 + $0xc] sm:$0xf]
      %v981 = vsel %vm387, %v978, 0
      %v984 = vsel %vm505, %v979, 0
      %986 = vmatprep.subr.bf16.mxu0 0
      %987 = vmatpush1.bf16.msra.mxu0 %v984
      %988 = vmatprep.subr.bf16.mxu0 0
      %989 = vmatpush1.bf16.msra.mxu0 0
      %990 = vmatprep.subr.bf16.mxu0 0
      %991 = vmatpush1.bf16.msra.mxu0 0
      %992 = vmatprep.subr.bf16.mxu0 0
      %993 = vmatpush1.bf16.msra.mxu0 0
      %994 = vmatprep.subr.bf16.mxu0 0
      %995 = vmatpush1.bf16.msra.mxu0 0
      %996 = vmatprep.subr.bf16.mxu0 0
      %997 = vmatpush1.bf16.msra.mxu0 0
      %998 = vmatprep.subr.bf16.mxu0 0
      %999 = vmatpush1.bf16.msra.mxu0 0
      %1000 = vmatprep.subr.bf16.mxu0 0
      %1001 = vmatpush1.bf16.msra.mxu0 0
      %1002 = vmatprep.subr.bf16.mxu0 0
      %1003 = vmatpush1.bf16.msra.mxu0 0
      %1004 = vmatprep.subr.bf16.mxu0 0
      %1005 = vmatpush1.bf16.msra.mxu0 0
      %1006 = vmatprep.subr.bf16.mxu0 0
      %1007 = vmatpush1.bf16.msra.mxu0 0
      %1008 = vmatprep.subr.bf16.mxu0 0
      %1009 = vmatpush1.bf16.msra.mxu0 0
      %1010 = vmatprep.subr.bf16.mxu0 0
      %1011 = vmatpush1.bf16.msra.mxu0 0
      %1012 = vmatprep.subr.bf16.mxu0 0
      %1013 = vmatpush1.bf16.msra.mxu0 0
      %1014 = vmatprep.subr.bf16.mxu0 0
      %1015 = vmatpush1.bf16.msra.mxu0 0
      %1016 = vmatprep.subr.bf16.mxu0 0
      %1017 = vmatpush1.bf16.msra.mxu0 0
      %1018 = vmatprep.mubr.bf16.mxu0 0
      %1019 = vmatmul.mubr.bf16.gmra.mrb[0].mxu0 %v981
      %v1020 = vpop.f32.mrb[0].mxu0
      %v1021 = vadd.f32 0.0, %v1020
      %v1022 = vpop.f32.mrb[0].mxu0
      %v1023 = vpop.f32.mrb[0].mxu0
      %v1024 = vpop.f32.mrb[0].mxu0
      %1025 = vdwg.mxu0
      %v1026 = vadd.f32 %v867, %v1021
      %1027 = vst.msk [vmem:[%s273] sm:$0x1f] %vm278, %v1026
      %p1028 = scmp.lt.s32.totalorder %s18, 1
      %s1029 = scalar_select %p1028, %s18, 1
      %s1030 = smul.addr %s1029, 8
      %s1031 = scalar_lea.vmem %s7, %s1030
      // Predicated region
      $region49: #{clip_visual_forward.9} parent=47 // pred_check
        %p1032 = pneg %p188
      $region50: #{clip_visual_forward.9} parent=47 // pred_check_branch
        %1034 = sbr.rel (%p1032) target = $region52
      $region51: #{clip_visual_forward.9} parent=47 // pred_region
        _
      $region52: #{clip_visual_forward.9} parent=47 // pred_fallthru
        _
    $region48: #{clip_visual_forward.9} parent=5 // pred_fallthru
      _
    %p1035 = scmp.le.s32.totalorder 2, %s13
    // Predicated region
    $region53: #{clip_visual_forward.9} parent=5 // pred_check
      %p1036 = pneg %p1035
    $region54: #{clip_visual_forward.9} parent=5 // pred_check_branch
      %1038 = sbr.rel (%p1036) target = $region56
    $region55: #{clip_visual_forward.9} parent=5 // pred_region
      %s1039 = ssub.s32 %s13, 2
      // Predicated region
      $region57: #{clip_visual_forward.9} parent=55 // pred_check
        %p1040 = pneg %p194
      $region58: #{clip_visual_forward.9} parent=55 // pred_check_branch
        %1042 = sbr.rel (%p1040) target = $region60
      $region59: #{clip_visual_forward.9} parent=55 // pred_region
        %p1043 = scmp.lt.s32.totalorder %s19, 1
        %s1044 = scalar_select %p1043, %s19, 1
        %s1045 = smul.addr %s1044, 8
        %s1046 = scalar_lea.vmem %s7, %s1045
      $region60: #{clip_visual_forward.9} parent=55 // pred_fallthru
        _
    $region56: #{clip_visual_forward.9} parent=5 // pred_fallthru
      _
  $region6: #{clip_visual_forward.9} parent=0 // loop_footer
    %s17 = sadd.s32 1, %s13
  $region7: #{clip_visual_forward.9} parent=0 // loop_footer_branch
    %12 = sbr.rel target = $region3
  $region8: #{clip_visual_forward.9} parent=0 // loop_exit
    _

// kernel: clip_visual_forward.13
$region0: #{clip_visual_forward.13}
  #allocation0 [shape = 'u32[]', space=smem, size = 0x4, offset = 0x4, fixed_abs, tag = 'smem constant byte address 0x4 - core index']
  #allocation1 [shape = 'u32[144,128]{1,0:T(1,128)}', space=vmem, size = 0x12000, scoped, tag = 'internal scratch']
  %s0 = inlined_call_operand.vmem [shape: f32[2,32], index: 0, kind: input, shape index: {}]
  %s1 = inlined_call_operand.vmem [shape: f32[1,32], index: 1, kind: input, shape index: {}]
  %s2 = inlined_call_operand.vmem [shape: f32[1,32], index: 2, kind: input, shape index: {}]
  %s3 = inlined_call_operand.vmem [shape: bf16[32,128], index: 3, kind: input, shape index: {}]
  %s4 = inlined_call_operand.vmem [shape: f32[1,128], index: 4, kind: input, shape index: {}]
  %s5 = inlined_call_operand.hbm [shape: f32[2,128], index: 5, kind: output, shape index: {}]
  %s6 = sld [smem:[#allocation0]]
  $region30: #{clip_visual_forward.13} parent=0
    _
  %s8 = ssub.s32 1, %s6
  %s9 = scalar_select 0, %s8, %s6
  $region1: #{clip_visual_forward.13} parent=0
    #allocation2 [shape = 'u8[1024]{0}', space=vmem, size = 0x400, scoped, tag = 'output window, operand 0, single buffered']
    #allocation3 [shape = 's32[1]{0}', space=sflag, size = 0x4, scoped, tag = 'scoped memory for clip_visual_forward.13']
    %10 = vsyncpa [#allocation3], 0
    // Predicated region
    $region2: #{clip_visual_forward.13} parent=1 // pred_check
      _
    $region3: #{clip_visual_forward.13} parent=1 // pred_check_branch
      %12 = sbr.rel (0) target = $region5
    $region4: #{clip_visual_forward.13} parent=1 // pred_region
      _
    $region5: #{clip_visual_forward.13} parent=1 // pred_fallthru
      _
    // Predicated region
    $region6: #{clip_visual_forward.13} parent=1 // pred_check
      _
    $region7: #{clip_visual_forward.13} parent=1 // pred_check_branch
      %14 = sbr.rel (0) target = $region9
    $region8: #{clip_visual_forward.13} parent=1 // pred_region
      _
    $region9: #{clip_visual_forward.13} parent=1 // pred_fallthru
      _
    // Predicated region
    $region10: #{clip_visual_forward.13} parent=1 // pred_check
      _
    $region11: #{clip_visual_forward.13} parent=1 // pred_check_branch
      %16 = sbr.rel (0) target = $region13
    $region12: #{clip_visual_forward.13} parent=1 // pred_region
      _
    $region13: #{clip_visual_forward.13} parent=1 // pred_fallthru
      _
    // Predicated region
    $region14: #{clip_visual_forward.13} parent=1 // pred_check
      _
    $region15: #{clip_visual_forward.13} parent=1 // pred_check_branch
      %18 = sbr.rel (0) target = $region17
    $region16: #{clip_visual_forward.13} parent=1 // pred_region
      _
    $region17: #{clip_visual_forward.13} parent=1 // pred_fallthru
      _
    // Predicated region
    $region18: #{clip_visual_forward.13} parent=1 // pred_check
      _
    $region19: #{clip_visual_forward.13} parent=1 // pred_check_branch
      %20 = sbr.rel (0) target = $region21
    $region20: #{clip_visual_forward.13} parent=1 // pred_region
      _
    $region21: #{clip_visual_forward.13} parent=1 // pred_fallthru
      _
    %v22 = vld [vmem:[%s0] sm:$0x3]
    %v23 = vld [vmem:[%s1] sm:$0x1]
    %v24 = vld [vmem:[%s2] sm:$0x1]
    %vm25 = vcmask 254976
    %v26 = vsel %vm25, %v22, 0.0
    %27 = vadd.xlane.f32.xlu0 %v26
    %v28 = vpop.xlane.xlu0 %27
    %v29 = vrcp.pop 32.0
    %v30 = vmul.f32 %v28, %v29
    %v31 = vsub.f32 %v22, %v30
    %v32 = vmul.f32 %v31, %v31
    %v33 = vsel %vm25, %v32, 0.0
    %34 = vadd.xlane.f32.xlu0 %v33
    %v35 = vpop.xlane.xlu0 %34
    %v36 = vmul.f32 %v35, %v29
    %v37 = vadd.f32 %v36, 1e-05
    %v38 = vrsqrt.pop %v37
    %v39 = vmul.f32 %v31, %v38
    %v41 = vlaneseq
    %v42 = vshrl.u32 %v41, 7
    %v43 = vsub.s32 0, %v42
    %v44 = vrot.slane %v23, %v43
    %v46 = vmul.f32 %v39, %v44
    %v48 = vlaneseq
    %v49 = vshrl.u32 %v48, 7
    %v50 = vsub.s32 0, %v49
    %v51 = vrot.slane %v24, %v50
    %v53 = vadd.f32 %v46, %v51
    %v54 = vpack.c.bf16 %v53, %v53
    %v55 = vld [vmem:[%s3] sm:$0xf]
    %v56 = vld [vmem:[%s3 + $0x4] sm:$0xf]
    %v57 = vld [vmem:[%s3 + $0x8] sm:$0xf]
    %v58 = vld [vmem:[%s3 + $0xc] sm:$0xf]
    %v59 = vld [vmem:[%s4] sm:$0x1]
    %v61 = vlaneseq
    %v62 = vshrl.u32 %v61, 7
    %v63 = vsub.s32 0, %v62
    %v64 = vrot.slane %v59, %v63
    %v70 = vunpack.c.l.b16 %v55
    %v71 = vunpack.c.l.b16 %v56
    %v72 = vunpack.c.l.b16 %v57
    %v73 = vunpack.c.l.b16 %v58
    %v74 = vpack.c.b16 %v71, %v70
    %v75 = vpack.c.b16 %v73, %v72
    %vm78 = vcmask 261120
    %v80 = vsel %vm78, %v54, 0
    %82 = vmatprep.subr.bf16.mxu0 0
    %83 = vmatpush1.bf16.msra.mxu0 %v74
    %84 = vmatprep.subr.bf16.mxu0 0
    %85 = vmatpush1.bf16.msra.mxu0 %v75
    %86 = vmatprep.subr.bf16.mxu0 0
    %87 = vmatpush1.bf16.msra.mxu0 0
    %88 = vmatprep.subr.bf16.mxu0 0
    %89 = vmatpush1.bf16.msra.mxu0 0
    %90 = vmatprep.subr.bf16.mxu0 0
    %91 = vmatpush1.bf16.msra.mxu0 0
    %92 = vmatprep.subr.bf16.mxu0 0
    %93 = vmatpush1.bf16.msra.mxu0 0
    %94 = vmatprep.subr.bf16.mxu0 0
    %95 = vmatpush1.bf16.msra.mxu0 0
    %96 = vmatprep.subr.bf16.mxu0 0
    %97 = vmatpush1.bf16.msra.mxu0 0
    %98 = vmatprep.subr.bf16.mxu0 0
    %99 = vmatpush1.bf16.msra.mxu0 0
    %100 = vmatprep.subr.bf16.mxu0 0
    %101 = vmatpush1.bf16.msra.mxu0 0
    %102 = vmatprep.subr.bf16.mxu0 0
    %103 = vmatpush1.bf16.msra.mxu0 0
    %104 = vmatprep.subr.bf16.mxu0 0
    %105 = vmatpush1.bf16.msra.mxu0 0
    %106 = vmatprep.subr.bf16.mxu0 0
    %107 = vmatpush1.bf16.msra.mxu0 0
    %108 = vmatprep.subr.bf16.mxu0 0
    %109 = vmatpush1.bf16.msra.mxu0 0
    %110 = vmatprep.subr.bf16.mxu0 0
    %111 = vmatpush1.bf16.msra.mxu0 0
    %112 = vmatprep.subr.bf16.mxu0 0
    %113 = vmatpush1.bf16.msra.mxu0 0
    %114 = vmatprep.mubr.bf16.mxu0 0
    %115 = vmatmul.mubr.bf16.gmra.mrb[0].mxu0 %v80
    %v116 = vpop.f32.mrb[0].mxu0
    %v117 = vadd.f32 %v64, %v116
    %v118 = vpop.f32.mrb[0].mxu0
    %v119 = vpop.f32.mrb[0].mxu0
    %v120 = vpop.f32.mrb[0].mxu0
    %121 = vdwg.mxu0
    %122 = vst [vmem:[#allocation2] sm:$0x3] %v117
    // Predicated region
    $region22: #{clip_visual_forward.13} parent=1 // pred_check
      _
    $region23: #{clip_visual_forward.13} parent=1 // pred_check_branch
      %124 = sbr.rel (0) target = $region25
    $region24: #{clip_visual_forward.13} parent=1 // pred_region
      %s126 = ssub.s32 32, 32
      %127 = vsyncadd [#allocation3], %s126
      %s129 = sshll.u32 [#allocation2], 4
      %s130 = int_to_ptr.vmem [resolvable:$true] %s129
      %132 = dma.vmem_to_hbm [thread:$0]  %s130, 32, %s5, [#allocation3]
    $region25: #{clip_visual_forward.13} parent=1 // pred_fallthru
      _
    // Predicated region
    $region26: #{clip_visual_forward.13} parent=1 // pred_check
      _
    $region27: #{clip_visual_forward.13} parent=1 // pred_check_branch
      %134 = sbr.rel (0) target = $region29
    $region28: #{clip_visual_forward.13} parent=1 // pred_region
      %135 = dma.done [#allocation3], 32
    $region29: #{clip_visual_forward.13} parent=1 // pred_fallthru
      _
    %136 = vsyncpa [#allocation3], 1

</llo_original>
